<compile_context>
chip_gen: v5e
topology: v5e:2x2
jax: 0.10.0
libtpu: 0.0.40
codegen_flags: <defaults>
</compile_context>

<pallas_src>
import jax
import jax.numpy as jnp
import numpy as np
from jax.experimental import pallas as pl
from jax.experimental.pallas import tpu as pltpu

EPS = 1e-5
REF_PREC = jax.lax.Precision.HIGHEST   # reference only


# ----------------------------------------------------------------------------
# Fused kernel: upsample (ConvTranspose2d k=2,s=2) + concat + double_conv.
# ----------------------------------------------------------------------------
def up_conv_pallas(xs, skip_cm, masks, w_up, b_up, w1, s1, b1, w2, s2, b2, *, H, W):
    """Fused up_conv forward, channel-major layout (spatial on lanes).

    xs      : (N, Cin, M)       bf16  nearest-neighbour 2x spread of x, M = 2H*2W
    skip_cm : (N, Cskip, M)     f32   skip in native NCHW order, spatial flattened
    masks   : (6, M)            bf16  [col>0, col<WW-1, parity(0,0),(0,1),(1,0),(1,1)]
    w_up    : (4*Cout, Cin)     bf16  rows ordered ((di*2+dj)*Cout + co)
    b_up    : (Cout, 1)         f32
    w1      : (3, Cout, 3*C1in) bf16  indexed [dh, co, dw*C1in + ci]
    s1, b1  : (Cout, 1)         f32   folded BN scale / bias (conv bias included)
    w2      : (3, Cout, 3*Cout) bf16
    s2, b2  : (Cout, 1)         f32
    """
    N, Cin, M = xs.shape
    _, Cskip, _ = skip_cm.shape
    Cout = b_up.shape[0]
    WW = 2 * W
    assert M == (2 * H) * WW
    C1 = Cskip + Cout
    assert w1.shape == (3, Cout, 3 * C1)
    assert w2.shape == (3, Cout, 3 * Cout)

    def shift_lanes(a, k):
        # result[:, m] = a[:, m + k] when 0 <= m + k < M, else 0  (k is static).
        if k == 0:
            return a
        z = jnp.zeros((a.shape[0], abs(k)), a.dtype)
        if k > 0:
            return jnp.concatenate([a[:, k:], z], axis=1)
        return jnp.concatenate([z, a[:, :k]], axis=1)

    def conv3x3_bn_relu(a, w_ref, s_ref, b_ref, ml, mr):
        # a: (C, M) bf16 channel-major -> (Cout, M) f32.  3 dh-group matmuls with
        # K = 3*C and N = M (lane-dense); taps via lane shifts + boundary masks.
        acc = jnp.zeros((Cout, M), jnp.float32)
        for dh in range(3):
            r = shift_lanes(a, (dh - 1) * WW)        # row tap; zero-filled OOB rows
            slab = jnp.concatenate(
                [shift_lanes(r, -1) * ml,            # dw = 0  (mask col j == 0)
                 r,                                  # dw = 1
                 shift_lanes(r, +1) * mr],           # dw = 2  (mask col j == WW-1)
                axis=0)                              # (3*C, M) bf16
            acc = acc + jnp.dot(w_ref[dh], slab,
                                preferred_element_type=jnp.float32)
        return jnp.maximum(acc * s_ref[...] + b_ref[...], 0.0)   # f32 epilogue (VPU)

    def kernel(xs_ref, skip_ref, m_ref, wup_ref, bup_ref,
               w1_ref, s1_ref, b1_ref, w2_ref, s2_ref, b2_ref, o_ref):
        ml = m_ref[0:1, :]                           # (1, M) column-boundary masks
        mr = m_ref[1:2, :]

        # ---- ConvTranspose2d(k=2, s=2): one MXU matmul over the 2x-spread input,
        #      then a per-lane parity select (no depth-to-space relayout).
        y = jnp.dot(wup_ref[...], xs_ref[0],
                    preferred_element_type=jnp.float32)          # (4*Cout, M) f32
        up = (m_ref[2:3, :] * y[0 * Cout:1 * Cout, :]
              + m_ref[3:4, :] * y[1 * Cout:2 * Cout, :]
              + m_ref[4:5, :] * y[2 * Cout:3 * Cout, :]
              + m_ref[5:6, :] * y[3 * Cout:4 * Cout, :]) + bup_ref[...]

        # ---- torch.cat([skip, up], dim=1): channel (sublane) concat, VMEM only.
        cat = jnp.concatenate(
            [skip_ref[0].astype(jnp.bfloat16), up.astype(jnp.bfloat16)], axis=0)

        # ---- double_conv with every intermediate VMEM-resident.
        h1 = conv3x3_bn_relu(cat, w1_ref, s1_ref, b1_ref, ml, mr)
        h2 = conv3x3_bn_relu(h1.astype(jnp.bfloat16), w2_ref, s2_ref, b2_ref, ml, mr)
        o_ref[0] = h2.astype(o_ref.dtype)            # lane-dense bf16 store

    return pl.pallas_call(
        kernel,
        out_shape=jax.ShapeDtypeStruct((N, Cout, M), jnp.bfloat16),
        grid=(N,),
        in_specs=[
            pl.BlockSpec((1, Cin, M), lambda n: (n, 0, 0)),
            pl.BlockSpec((1, Cskip, M), lambda n: (n, 0, 0)),
            pl.BlockSpec((6, M), lambda n: (0, 0)),
            pl.BlockSpec((4 * Cout, Cin), lambda n: (0, 0)),
            pl.BlockSpec((Cout, 1), lambda n: (0, 0)),
            pl.BlockSpec((3, Cout, 3 * C1), lambda n: (0, 0, 0)),
            pl.BlockSpec((Cout, 1), lambda n: (0, 0)),
            pl.BlockSpec((Cout, 1), lambda n: (0, 0)),
            pl.BlockSpec((3, Cout, 3 * Cout), lambda n: (0, 0, 0)),
            pl.BlockSpec((Cout, 1), lambda n: (0, 0)),
            pl.BlockSpec((Cout, 1), lambda n: (0, 0)),
        ],
        out_specs=pl.BlockSpec((1, Cout, M), lambda n: (n, 0, 0)),
        compiler_params=pltpu.CompilerParams(dimension_semantics=("parallel",)),
    )(xs, skip_cm, masks, w_up, b_up, w1, s1, b1, w2, s2, b2)


# ----------------------------------------------------------------------------
# Parameter init (deterministic, PyTorch shape conventions) and forward glue.
# ----------------------------------------------------------------------------
def init_params(key, in_channels, out_channels, after_skip=None):
    if after_skip is None:
        after_skip = 2 * out_channels
    ks = jax.random.split(key, 16)
    n = lambda k, s, scl=0.1: scl * jax.random.normal(k, s, jnp.float32)
    p = {
        # ConvTranspose2d(in, out, 2, stride=2): weight (Cin, Cout, 2, 2)
        "up_w": n(ks[0], (in_channels, out_channels, 2, 2)),
        "up_b": n(ks[1], (out_channels,)),
        # Conv2d(after_skip, out, 3, pad=1): weight (Cout, Cin, 3, 3)
        "c1_w": n(ks[2], (out_channels, after_skip, 3, 3)),
        "c1_b": n(ks[3], (out_channels,)),
        "bn1_g": 1.0 + n(ks[4], (out_channels,)),
        "bn1_b": n(ks[5], (out_channels,)),
        "bn1_m": n(ks[6], (out_channels,)),
        "bn1_v": 1.0 + 0.1 * jax.random.uniform(ks[7], (out_channels,), jnp.float32),
        "c2_w": n(ks[8], (out_channels, out_channels, 3, 3)),
        "c2_b": n(ks[9], (out_channels,)),
        "bn2_g": 1.0 + n(ks[10], (out_channels,)),
        "bn2_b": n(ks[11], (out_channels,)),
        "bn2_m": n(ks[12], (out_channels,)),
        "bn2_v": 1.0 + 0.1 * jax.random.uniform(ks[13], (out_channels,), jnp.float32),
    }
    return p


def _fold_bn_grouped(w_oihw, conv_b, gamma, beta, mean, var):
    """Fold eval-mode BN into (dh-grouped weight, scale, bias); weight -> bf16.

    Returned weight is (3, Cout, 3*Cin) indexed [dh, co, dw*Cin + ci].
    """
    s = gamma / jnp.sqrt(var + EPS)
    bias = s * (conv_b - mean) + beta
    cout, cin = w_oihw.shape[0], w_oihw.shape[1]
    w = jnp.transpose(w_oihw, (2, 0, 3, 1)).reshape(3, cout, 3 * cin)
    return w.astype(jnp.bfloat16), s.reshape(cout, 1), bias.reshape(cout, 1)


def up_conv_forward(skip_nchw, x_nchw, p):
    N, Cin, H, W = x_nchw.shape
    _, Cskip, H2, W2 = skip_nchw.shape
    assert (H2, W2) == (2 * H, 2 * W)
    Cout = p["up_w"].shape[1]
    HH, WW = 2 * H, 2 * W
    M = HH * WW

    # Nearest-neighbour 2x spread of x (each pixel copied to its 2x2 block); the
    # per-parity ConvTranspose weight is selected inside the kernel with masks.
    xs = jnp.broadcast_to(x_nchw[:, :, :, None, :, None], (N, Cin, H, 2, W, 2))
    xs = xs.reshape(N, Cin, M).astype(jnp.bfloat16)

    # Skip stays in its native NCHW (channel-major) layout; flattening is free.
    skip_cm = skip_nchw.reshape(N, Cskip, M)

    # Precomputed 0/1 masks: conv column-boundary validity + the 4 output parities.
    cols = jnp.arange(M, dtype=jnp.int32) % WW
    rows = jnp.arange(M, dtype=jnp.int32) // WW
    masks = jnp.stack([
        cols != 0,
        cols != WW - 1,
        ((rows % 2) == 0) & ((cols % 2) == 0),
        ((rows % 2) == 0) & ((cols % 2) == 1),
        ((rows % 2) == 1) & ((cols % 2) == 0),
        ((rows % 2) == 1) & ((cols % 2) == 1),
    ]).astype(jnp.bfloat16)                                        # (6, M)

    # ConvTranspose2d weight (Cin, Cout, 2, 2) -> (4*Cout, Cin), rows (di, dj, co).
    w_up = jnp.transpose(p["up_w"], (2, 3, 1, 0)).reshape(4 * Cout, Cin)
    w_up = w_up.astype(jnp.bfloat16)
    b_up = p["up_b"].reshape(Cout, 1)

    w1, s1, b1 = _fold_bn_grouped(p["c1_w"], p["c1_b"],
                                  p["bn1_g"], p["bn1_b"], p["bn1_m"], p["bn1_v"])
    w2, s2, b2 = _fold_bn_grouped(p["c2_w"], p["c2_b"],
                                  p["bn2_g"], p["bn2_b"], p["bn2_m"], p["bn2_v"])

    out = up_conv_pallas(xs, skip_cm, masks, w_up, b_up, w1, s1, b1, w2, s2, b2,
                         H=H, W=W)
    return out.reshape(N, Cout, HH, WW)        # already NCHW; activations in bf16


# ----------------------------------------------------------------------------
# Pure-JAX (lax.conv, f32 HIGHEST precision) reference for correctness checking.
# ----------------------------------------------------------------------------
def ref_forward(skip, x, p):
    w_oihw = jnp.transpose(p["up_w"][:, :, ::-1, ::-1], (1, 0, 2, 3))
    up = jax.lax.conv_general_dilated(
        x, w_oihw, window_strides=(1, 1), padding=((1, 1), (1, 1)),
        lhs_dilation=(2, 2), dimension_numbers=("NCHW", "OIHW", "NCHW"),
        precision=REF_PREC) + p["up_b"][None, :, None, None]
    h = jnp.concatenate([skip, up], axis=1)

    def conv_bn_relu(h, w, cb, g, b, m, v):
        h = jax.lax.conv_general_dilated(
            h, w, (1, 1), ((1, 1), (1, 1)),
            dimension_numbers=("NCHW", "OIHW", "NCHW"), precision=REF_PREC)
        h = h + cb[None, :, None, None]
        s = g / jnp.sqrt(v + EPS)
        h = (h - m[None, :, None, None]) * s[None, :, None, None] + b[None, :, None, None]
        return jnp.maximum(h, 0.0)

    h = conv_bn_relu(h, p["c1_w"], p["c1_b"], p["bn1_g"], p["bn1_b"], p["bn1_m"], p["bn1_v"])
    h = conv_bn_relu(h, p["c2_w"], p["c2_b"], p["bn2_g"], p["bn2_b"], p["bn2_m"], p["bn2_v"])
    return h


if __name__ == "__main__":
    key = jax.random.PRNGKey(0)
    k_skip, k_x, k_p = jax.random.split(key, 3)

    in_channels, out_channels = 8, 4           # after_skip = 2*out_channels = 8
    N, H, W = 2, 8, 8                          # x is upsampled 2x -> matches skip
    x = jax.random.normal(k_x, (N, in_channels, H, W), jnp.float32)
    skip = jax.random.normal(k_skip, (N, out_channels, 2 * H, 2 * W), jnp.float32)
    params = init_params(k_p, in_channels, out_channels)

    out = jax.block_until_ready(up_conv_forward(skip, x, params))
    ref = jax.block_until_ready(ref_forward(skip, x, params))

    assert out.shape == (N, out_channels, 2 * H, 2 * W), out.shape
    # bf16 MXU operands / bf16 output with f32 accumulation -> loose tolerance vs
    # the f32-HIGHEST reference.
    np.testing.assert_allclose(np.asarray(out.astype(jnp.float32)),
                               np.asarray(ref), rtol=5e-2, atol=3e-2)
    print("KERNEL_OK")
</pallas_src>

<mosaic_0001>
module attributes {stable_mosaic.version = 11 : i64} {
  func.func @kernel(%arg0: i32, %arg1: memref<1x8x256xbf16, #tpu.memory_space<vmem>>, %arg2: memref<1x4x256xf32, #tpu.memory_space<vmem>>, %arg3: memref<6x256xbf16, #tpu.memory_space<vmem>>, %arg4: memref<16x8xbf16, #tpu.memory_space<vmem>>, %arg5: memref<4x1xf32, #tpu.memory_space<vmem>>, %arg6: memref<3x4x24xbf16, #tpu.memory_space<vmem>>, %arg7: memref<4x1xf32, #tpu.memory_space<vmem>>, %arg8: memref<4x1xf32, #tpu.memory_space<vmem>>, %arg9: memref<3x4x12xbf16, #tpu.memory_space<vmem>>, %arg10: memref<4x1xf32, #tpu.memory_space<vmem>>, %arg11: memref<4x1xf32, #tpu.memory_space<vmem>>, %arg12: memref<1x4x256xbf16, #tpu.memory_space<vmem>>) attributes {dimension_semantics = [#tpu.dimension_semantics<parallel>], iteration_bounds = array<i64: 2>, scalar_prefetch = 0 : i64, scratch_operands = 0 : i64, tpu.core_type = #tpu.core_type<tc>, window_params = [{transform_indices = @transform_0, window_bounds = array<i64: 1, 8, 256>}, {transform_indices = @transform_1, window_bounds = array<i64: 1, 4, 256>}, {pipeline_mode = #tpu.pipeline_mode<synchronous>, transform_indices = @transform_2, window_bounds = array<i64: 6, 256>}, {pipeline_mode = #tpu.pipeline_mode<synchronous>, transform_indices = @transform_3, window_bounds = array<i64: 16, 8>}, {pipeline_mode = #tpu.pipeline_mode<synchronous>, transform_indices = @transform_4, window_bounds = array<i64: 4, 1>}, {pipeline_mode = #tpu.pipeline_mode<synchronous>, transform_indices = @transform_5, window_bounds = array<i64: 3, 4, 24>}, {pipeline_mode = #tpu.pipeline_mode<synchronous>, transform_indices = @transform_6, window_bounds = array<i64: 4, 1>}, {pipeline_mode = #tpu.pipeline_mode<synchronous>, transform_indices = @transform_7, window_bounds = array<i64: 4, 1>}, {pipeline_mode = #tpu.pipeline_mode<synchronous>, transform_indices = @transform_8, window_bounds = array<i64: 3, 4, 12>}, {pipeline_mode = #tpu.pipeline_mode<synchronous>, transform_indices = @transform_9, window_bounds = array<i64: 4, 1>}, {pipeline_mode = #tpu.pipeline_mode<synchronous>, transform_indices = @transform_10, window_bounds = array<i64: 4, 1>}, {transform_indices = @transform_11, window_bounds = array<i64: 1, 4, 256>}]} {
    %c0 = arith.constant 0 : index
    %c0_0 = arith.constant 0 : index
    %0 = vector.load %arg3[%c0, %c0_0] : memref<6x256xbf16, #tpu.memory_space<vmem>>, vector<1x256xbf16>
    %c1 = arith.constant 1 : index
    %c0_1 = arith.constant 0 : index
    %1 = vector.load %arg3[%c1, %c0_1] : memref<6x256xbf16, #tpu.memory_space<vmem>>, vector<1x256xbf16>
    %c0_2 = arith.constant 0 : index
    %c0_3 = arith.constant 0 : index
    %2 = vector.load %arg4[%c0_2, %c0_3] : memref<16x8xbf16, #tpu.memory_space<vmem>>, vector<16x8xbf16>
    %c0_4 = arith.constant 0 : index
    %c0_5 = arith.constant 0 : index
    %c0_6 = arith.constant 0 : index
    %3 = vector.load %arg1[%c0_4, %c0_5, %c0_6] : memref<1x8x256xbf16, #tpu.memory_space<vmem>>, vector<1x8x256xbf16>
    %4 = vector.shape_cast %3 : vector<1x8x256xbf16> to vector<8x256xbf16>
    %cst = arith.constant dense<0.000000e+00> : vector<16x256xf32>
    %5 = tpu.matmul %2, %4, %cst {dimension_numbers = #tpu.dot_dimension_numbers<[1], [0], [0], [1], [0, 0, 1, 1], [], []>} : vector<16x8xbf16>, vector<8x256xbf16>, vector<16x256xf32> -> vector<16x256xf32>
    %c2 = arith.constant 2 : index
    %c0_7 = arith.constant 0 : index
    %6 = vector.load %arg3[%c2, %c0_7] : memref<6x256xbf16, #tpu.memory_space<vmem>>, vector<1x256xbf16>
    %7 = vector.extract_strided_slice %5 {offsets = [0, 0], sizes = [4, 256], strides = [1, 1]} : vector<16x256xf32> to vector<4x256xf32>
    %8 = arith.extf %6 : vector<1x256xbf16> to vector<1x256xf32>
    %9 = vector.broadcast %8 : vector<1x256xf32> to vector<4x256xf32>
    %10 = arith.mulf %9, %7 : vector<4x256xf32>
    %c3 = arith.constant 3 : index
    %c0_8 = arith.constant 0 : index
    %11 = vector.load %arg3[%c3, %c0_8] : memref<6x256xbf16, #tpu.memory_space<vmem>>, vector<1x256xbf16>
    %12 = vector.extract_strided_slice %5 {offsets = [4, 0], sizes = [4, 256], strides = [1, 1]} : vector<16x256xf32> to vector<4x256xf32>
    %13 = arith.extf %11 : vector<1x256xbf16> to vector<1x256xf32>
    %14 = vector.broadcast %13 : vector<1x256xf32> to vector<4x256xf32>
    %15 = arith.mulf %14, %12 : vector<4x256xf32>
    %16 = arith.addf %10, %15 : vector<4x256xf32>
    %c4 = arith.constant 4 : index
    %c0_9 = arith.constant 0 : index
    %17 = vector.load %arg3[%c4, %c0_9] : memref<6x256xbf16, #tpu.memory_space<vmem>>, vector<1x256xbf16>
    %18 = vector.extract_strided_slice %5 {offsets = [8, 0], sizes = [4, 256], strides = [1, 1]} : vector<16x256xf32> to vector<4x256xf32>
    %19 = arith.extf %17 : vector<1x256xbf16> to vector<1x256xf32>
    %20 = vector.broadcast %19 : vector<1x256xf32> to vector<4x256xf32>
    %21 = arith.mulf %20, %18 : vector<4x256xf32>
    %22 = arith.addf %16, %21 : vector<4x256xf32>
    %c5 = arith.constant 5 : index
    %c0_10 = arith.constant 0 : index
    %23 = vector.load %arg3[%c5, %c0_10] : memref<6x256xbf16, #tpu.memory_space<vmem>>, vector<1x256xbf16>
    %24 = vector.extract_strided_slice %5 {offsets = [12, 0], sizes = [4, 256], strides = [1, 1]} : vector<16x256xf32> to vector<4x256xf32>
    %25 = arith.extf %23 : vector<1x256xbf16> to vector<1x256xf32>
    %26 = vector.broadcast %25 : vector<1x256xf32> to vector<4x256xf32>
    %27 = arith.mulf %26, %24 : vector<4x256xf32>
    %28 = arith.addf %22, %27 : vector<4x256xf32>
    %c0_11 = arith.constant 0 : index
    %c0_12 = arith.constant 0 : index
    %29 = vector.load %arg5[%c0_11, %c0_12] : memref<4x1xf32, #tpu.memory_space<vmem>>, vector<4x1xf32>
    %30 = vector.broadcast %29 : vector<4x1xf32> to vector<4x256xf32>
    %31 = arith.addf %28, %30 : vector<4x256xf32>
    %c0_13 = arith.constant 0 : index
    %c0_14 = arith.constant 0 : index
    %c0_15 = arith.constant 0 : index
    %32 = vector.load %arg2[%c0_13, %c0_14, %c0_15] : memref<1x4x256xf32, #tpu.memory_space<vmem>>, vector<1x4x256xf32>
    %33 = vector.shape_cast %32 : vector<1x4x256xf32> to vector<4x256xf32>
    %34 = arith.truncf %33 : vector<4x256xf32> to vector<4x256xbf16>
    %35 = arith.truncf %31 : vector<4x256xf32> to vector<4x256xbf16>
    %36 = tpu.concatenate %34, %35 in 0 : vector<4x256xbf16>, vector<4x256xbf16> -> vector<8x256xbf16>
    %cst_16 = arith.constant 0.000000e+00 : f32
    %37 = vector.broadcast %cst_16 : f32 to vector<4x256xf32>
    %cst_17 = arith.constant 0.000000e+00 : bf16
    %38 = vector.broadcast %cst_17 : bf16 to vector<8x16xbf16>
    %39 = vector.extract_strided_slice %36 {offsets = [0, 0], sizes = [8, 240], strides = [1, 1]} : vector<8x256xbf16> to vector<8x240xbf16>
    %40 = tpu.concatenate %38, %39 in 1 : vector<8x16xbf16>, vector<8x240xbf16> -> vector<8x256xbf16>
    %cst_18 = arith.constant 0.000000e+00 : bf16
    %41 = vector.broadcast %cst_18 : bf16 to vector<8x1xbf16>
    %42 = vector.extract_strided_slice %40 {offsets = [0, 0], sizes = [8, 255], strides = [1, 1]} : vector<8x256xbf16> to vector<8x255xbf16>
    %43 = tpu.concatenate %41, %42 in 1 : vector<8x1xbf16>, vector<8x255xbf16> -> vector<8x256xbf16>
    %44 = vector.broadcast %0 : vector<1x256xbf16> to vector<8x256xbf16>
    %45 = arith.mulf %43, %44 : vector<8x256xbf16>
    %cst_19 = arith.constant 0.000000e+00 : bf16
    %46 = vector.broadcast %cst_19 : bf16 to vector<8x1xbf16>
    %47 = vector.extract_strided_slice %40 {offsets = [0, 1], sizes = [8, 255], strides = [1, 1]} : vector<8x256xbf16> to vector<8x255xbf16>
    %48 = tpu.concatenate %47, %46 in 1 : vector<8x255xbf16>, vector<8x1xbf16> -> vector<8x256xbf16>
    %49 = vector.broadcast %1 : vector<1x256xbf16> to vector<8x256xbf16>
    %50 = arith.mulf %48, %49 : vector<8x256xbf16>
    %51 = tpu.concatenate %45, %40, %50 in 0 : vector<8x256xbf16>, vector<8x256xbf16>, vector<8x256xbf16> -> vector<24x256xbf16>
    %c0_20 = arith.constant 0 : index
    %c0_21 = arith.constant 0 : index
    %c0_22 = arith.constant 0 : index
    %52 = vector.load %arg6[%c0_20, %c0_21, %c0_22] : memref<3x4x24xbf16, #tpu.memory_space<vmem>>, vector<1x4x24xbf16>
    %53 = vector.shape_cast %52 : vector<1x4x24xbf16> to vector<4x24xbf16>
    %cst_23 = arith.constant dense<0.000000e+00> : vector<4x256xf32>
    %54 = tpu.matmul %53, %51, %cst_23 {dimension_numbers = #tpu.dot_dimension_numbers<[1], [0], [0], [1], [0, 0, 1, 1], [], []>} : vector<4x24xbf16>, vector<24x256xbf16>, vector<4x256xf32> -> vector<4x256xf32>
    %55 = arith.addf %37, %54 : vector<4x256xf32>
    %cst_24 = arith.constant 0.000000e+00 : bf16
    %56 = vector.broadcast %cst_24 : bf16 to vector<8x1xbf16>
    %57 = vector.extract_strided_slice %36 {offsets = [0, 0], sizes = [8, 255], strides = [1, 1]} : vector<8x256xbf16> to vector<8x255xbf16>
    %58 = tpu.concatenate %56, %57 in 1 : vector<8x1xbf16>, vector<8x255xbf16> -> vector<8x256xbf16>
    %59 = vector.broadcast %0 : vector<1x256xbf16> to vector<8x256xbf16>
    %60 = arith.mulf %58, %59 : vector<8x256xbf16>
    %cst_25 = arith.constant 0.000000e+00 : bf16
    %61 = vector.broadcast %cst_25 : bf16 to vector<8x1xbf16>
    %62 = vector.extract_strided_slice %36 {offsets = [0, 1], sizes = [8, 255], strides = [1, 1]} : vector<8x256xbf16> to vector<8x255xbf16>
    %63 = tpu.concatenate %62, %61 in 1 : vector<8x255xbf16>, vector<8x1xbf16> -> vector<8x256xbf16>
    %64 = vector.broadcast %1 : vector<1x256xbf16> to vector<8x256xbf16>
    %65 = arith.mulf %63, %64 : vector<8x256xbf16>
    %66 = tpu.concatenate %60, %36, %65 in 0 : vector<8x256xbf16>, vector<8x256xbf16>, vector<8x256xbf16> -> vector<24x256xbf16>
    %c1_26 = arith.constant 1 : index
    %c0_27 = arith.constant 0 : index
    %c0_28 = arith.constant 0 : index
    %67 = vector.load %arg6[%c1_26, %c0_27, %c0_28] : memref<3x4x24xbf16, #tpu.memory_space<vmem>>, vector<1x4x24xbf16>
    %68 = vector.shape_cast %67 : vector<1x4x24xbf16> to vector<4x24xbf16>
    %cst_29 = arith.constant dense<0.000000e+00> : vector<4x256xf32>
    %69 = tpu.matmul %68, %66, %cst_29 {dimension_numbers = #tpu.dot_dimension_numbers<[1], [0], [0], [1], [0, 0, 1, 1], [], []>} : vector<4x24xbf16>, vector<24x256xbf16>, vector<4x256xf32> -> vector<4x256xf32>
    %70 = arith.addf %55, %69 : vector<4x256xf32>
    %cst_30 = arith.constant 0.000000e+00 : bf16
    %71 = vector.broadcast %cst_30 : bf16 to vector<8x16xbf16>
    %72 = vector.extract_strided_slice %36 {offsets = [0, 16], sizes = [8, 240], strides = [1, 1]} : vector<8x256xbf16> to vector<8x240xbf16>
    %73 = tpu.concatenate %72, %71 in 1 : vector<8x240xbf16>, vector<8x16xbf16> -> vector<8x256xbf16>
    %cst_31 = arith.constant 0.000000e+00 : bf16
    %74 = vector.broadcast %cst_31 : bf16 to vector<8x1xbf16>
    %75 = vector.extract_strided_slice %73 {offsets = [0, 0], sizes = [8, 255], strides = [1, 1]} : vector<8x256xbf16> to vector<8x255xbf16>
    %76 = tpu.concatenate %74, %75 in 1 : vector<8x1xbf16>, vector<8x255xbf16> -> vector<8x256xbf16>
    %77 = vector.broadcast %0 : vector<1x256xbf16> to vector<8x256xbf16>
    %78 = arith.mulf %76, %77 : vector<8x256xbf16>
    %cst_32 = arith.constant 0.000000e+00 : bf16
    %79 = vector.broadcast %cst_32 : bf16 to vector<8x1xbf16>
    %80 = vector.extract_strided_slice %73 {offsets = [0, 1], sizes = [8, 255], strides = [1, 1]} : vector<8x256xbf16> to vector<8x255xbf16>
    %81 = tpu.concatenate %80, %79 in 1 : vector<8x255xbf16>, vector<8x1xbf16> -> vector<8x256xbf16>
    %82 = vector.broadcast %1 : vector<1x256xbf16> to vector<8x256xbf16>
    %83 = arith.mulf %81, %82 : vector<8x256xbf16>
    %84 = tpu.concatenate %78, %73, %83 in 0 : vector<8x256xbf16>, vector<8x256xbf16>, vector<8x256xbf16> -> vector<24x256xbf16>
    %c2_33 = arith.constant 2 : index
    %c0_34 = arith.constant 0 : index
    %c0_35 = arith.constant 0 : index
    %85 = vector.load %arg6[%c2_33, %c0_34, %c0_35] : memref<3x4x24xbf16, #tpu.memory_space<vmem>>, vector<1x4x24xbf16>
    %86 = vector.shape_cast %85 : vector<1x4x24xbf16> to vector<4x24xbf16>
    %cst_36 = arith.constant dense<0.000000e+00> : vector<4x256xf32>
    %87 = tpu.matmul %86, %84, %cst_36 {dimension_numbers = #tpu.dot_dimension_numbers<[1], [0], [0], [1], [0, 0, 1, 1], [], []>} : vector<4x24xbf16>, vector<24x256xbf16>, vector<4x256xf32> -> vector<4x256xf32>
    %88 = arith.addf %70, %87 : vector<4x256xf32>
    %c0_37 = arith.constant 0 : index
    %c0_38 = arith.constant 0 : index
    %89 = vector.load %arg7[%c0_37, %c0_38] : memref<4x1xf32, #tpu.memory_space<vmem>>, vector<4x1xf32>
    %90 = vector.broadcast %89 : vector<4x1xf32> to vector<4x256xf32>
    %91 = arith.mulf %88, %90 : vector<4x256xf32>
    %c0_39 = arith.constant 0 : index
    %c0_40 = arith.constant 0 : index
    %92 = vector.load %arg8[%c0_39, %c0_40] : memref<4x1xf32, #tpu.memory_space<vmem>>, vector<4x1xf32>
    %93 = vector.broadcast %92 : vector<4x1xf32> to vector<4x256xf32>
    %94 = arith.addf %91, %93 : vector<4x256xf32>
    %cst_41 = arith.constant 0.000000e+00 : f32
    %95 = vector.broadcast %cst_41 : f32 to vector<4x256xf32>
    %96 = arith.maximumf %94, %95 : vector<4x256xf32>
    %97 = arith.truncf %96 : vector<4x256xf32> to vector<4x256xbf16>
    %cst_42 = arith.constant 0.000000e+00 : f32
    %98 = vector.broadcast %cst_42 : f32 to vector<4x256xf32>
    %cst_43 = arith.constant 0.000000e+00 : bf16
    %99 = vector.broadcast %cst_43 : bf16 to vector<4x16xbf16>
    %100 = vector.extract_strided_slice %97 {offsets = [0, 0], sizes = [4, 240], strides = [1, 1]} : vector<4x256xbf16> to vector<4x240xbf16>
    %101 = tpu.concatenate %99, %100 in 1 : vector<4x16xbf16>, vector<4x240xbf16> -> vector<4x256xbf16>
    %cst_44 = arith.constant 0.000000e+00 : bf16
    %102 = vector.broadcast %cst_44 : bf16 to vector<4x1xbf16>
    %103 = vector.extract_strided_slice %101 {offsets = [0, 0], sizes = [4, 255], strides = [1, 1]} : vector<4x256xbf16> to vector<4x255xbf16>
    %104 = tpu.concatenate %102, %103 in 1 : vector<4x1xbf16>, vector<4x255xbf16> -> vector<4x256xbf16>
    %105 = vector.broadcast %0 : vector<1x256xbf16> to vector<4x256xbf16>
    %106 = arith.mulf %104, %105 : vector<4x256xbf16>
    %cst_45 = arith.constant 0.000000e+00 : bf16
    %107 = vector.broadcast %cst_45 : bf16 to vector<4x1xbf16>
    %108 = vector.extract_strided_slice %101 {offsets = [0, 1], sizes = [4, 255], strides = [1, 1]} : vector<4x256xbf16> to vector<4x255xbf16>
    %109 = tpu.concatenate %108, %107 in 1 : vector<4x255xbf16>, vector<4x1xbf16> -> vector<4x256xbf16>
    %110 = vector.broadcast %1 : vector<1x256xbf16> to vector<4x256xbf16>
    %111 = arith.mulf %109, %110 : vector<4x256xbf16>
    %112 = tpu.concatenate %106, %101, %111 in 0 : vector<4x256xbf16>, vector<4x256xbf16>, vector<4x256xbf16> -> vector<12x256xbf16>
    %c0_46 = arith.constant 0 : index
    %c0_47 = arith.constant 0 : index
    %c0_48 = arith.constant 0 : index
    %113 = vector.load %arg9[%c0_46, %c0_47, %c0_48] : memref<3x4x12xbf16, #tpu.memory_space<vmem>>, vector<1x4x12xbf16>
    %114 = vector.shape_cast %113 : vector<1x4x12xbf16> to vector<4x12xbf16>
    %cst_49 = arith.constant dense<0.000000e+00> : vector<4x256xf32>
    %115 = tpu.matmul %114, %112, %cst_49 {dimension_numbers = #tpu.dot_dimension_numbers<[1], [0], [0], [1], [0, 0, 1, 1], [], []>} : vector<4x12xbf16>, vector<12x256xbf16>, vector<4x256xf32> -> vector<4x256xf32>
    %116 = arith.addf %98, %115 : vector<4x256xf32>
    %cst_50 = arith.constant 0.000000e+00 : bf16
    %117 = vector.broadcast %cst_50 : bf16 to vector<4x1xbf16>
    %118 = vector.extract_strided_slice %97 {offsets = [0, 0], sizes = [4, 255], strides = [1, 1]} : vector<4x256xbf16> to vector<4x255xbf16>
    %119 = tpu.concatenate %117, %118 in 1 : vector<4x1xbf16>, vector<4x255xbf16> -> vector<4x256xbf16>
    %120 = vector.broadcast %0 : vector<1x256xbf16> to vector<4x256xbf16>
    %121 = arith.mulf %119, %120 : vector<4x256xbf16>
    %cst_51 = arith.constant 0.000000e+00 : bf16
    %122 = vector.broadcast %cst_51 : bf16 to vector<4x1xbf16>
    %123 = vector.extract_strided_slice %97 {offsets = [0, 1], sizes = [4, 255], strides = [1, 1]} : vector<4x256xbf16> to vector<4x255xbf16>
    %124 = tpu.concatenate %123, %122 in 1 : vector<4x255xbf16>, vector<4x1xbf16> -> vector<4x256xbf16>
    %125 = vector.broadcast %1 : vector<1x256xbf16> to vector<4x256xbf16>
    %126 = arith.mulf %124, %125 : vector<4x256xbf16>
    %127 = tpu.concatenate %121, %97, %126 in 0 : vector<4x256xbf16>, vector<4x256xbf16>, vector<4x256xbf16> -> vector<12x256xbf16>
    %c1_52 = arith.constant 1 : index
    %c0_53 = arith.constant 0 : index
    %c0_54 = arith.constant 0 : index
    %128 = vector.load %arg9[%c1_52, %c0_53, %c0_54] : memref<3x4x12xbf16, #tpu.memory_space<vmem>>, vector<1x4x12xbf16>
    %129 = vector.shape_cast %128 : vector<1x4x12xbf16> to vector<4x12xbf16>
    %cst_55 = arith.constant dense<0.000000e+00> : vector<4x256xf32>
    %130 = tpu.matmul %129, %127, %cst_55 {dimension_numbers = #tpu.dot_dimension_numbers<[1], [0], [0], [1], [0, 0, 1, 1], [], []>} : vector<4x12xbf16>, vector<12x256xbf16>, vector<4x256xf32> -> vector<4x256xf32>
    %131 = arith.addf %116, %130 : vector<4x256xf32>
    %cst_56 = arith.constant 0.000000e+00 : bf16
    %132 = vector.broadcast %cst_56 : bf16 to vector<4x16xbf16>
    %133 = vector.extract_strided_slice %97 {offsets = [0, 16], sizes = [4, 240], strides = [1, 1]} : vector<4x256xbf16> to vector<4x240xbf16>
    %134 = tpu.concatenate %133, %132 in 1 : vector<4x240xbf16>, vector<4x16xbf16> -> vector<4x256xbf16>
    %cst_57 = arith.constant 0.000000e+00 : bf16
    %135 = vector.broadcast %cst_57 : bf16 to vector<4x1xbf16>
    %136 = vector.extract_strided_slice %134 {offsets = [0, 0], sizes = [4, 255], strides = [1, 1]} : vector<4x256xbf16> to vector<4x255xbf16>
    %137 = tpu.concatenate %135, %136 in 1 : vector<4x1xbf16>, vector<4x255xbf16> -> vector<4x256xbf16>
    %138 = vector.broadcast %0 : vector<1x256xbf16> to vector<4x256xbf16>
    %139 = arith.mulf %137, %138 : vector<4x256xbf16>
    %cst_58 = arith.constant 0.000000e+00 : bf16
    %140 = vector.broadcast %cst_58 : bf16 to vector<4x1xbf16>
    %141 = vector.extract_strided_slice %134 {offsets = [0, 1], sizes = [4, 255], strides = [1, 1]} : vector<4x256xbf16> to vector<4x255xbf16>
    %142 = tpu.concatenate %141, %140 in 1 : vector<4x255xbf16>, vector<4x1xbf16> -> vector<4x256xbf16>
    %143 = vector.broadcast %1 : vector<1x256xbf16> to vector<4x256xbf16>
    %144 = arith.mulf %142, %143 : vector<4x256xbf16>
    %145 = tpu.concatenate %139, %134, %144 in 0 : vector<4x256xbf16>, vector<4x256xbf16>, vector<4x256xbf16> -> vector<12x256xbf16>
    %c2_59 = arith.constant 2 : index
    %c0_60 = arith.constant 0 : index
    %c0_61 = arith.constant 0 : index
    %146 = vector.load %arg9[%c2_59, %c0_60, %c0_61] : memref<3x4x12xbf16, #tpu.memory_space<vmem>>, vector<1x4x12xbf16>
    %147 = vector.shape_cast %146 : vector<1x4x12xbf16> to vector<4x12xbf16>
    %cst_62 = arith.constant dense<0.000000e+00> : vector<4x256xf32>
    %148 = tpu.matmul %147, %145, %cst_62 {dimension_numbers = #tpu.dot_dimension_numbers<[1], [0], [0], [1], [0, 0, 1, 1], [], []>} : vector<4x12xbf16>, vector<12x256xbf16>, vector<4x256xf32> -> vector<4x256xf32>
    %149 = arith.addf %131, %148 : vector<4x256xf32>
    %c0_63 = arith.constant 0 : index
    %c0_64 = arith.constant 0 : index
    %150 = vector.load %arg10[%c0_63, %c0_64] : memref<4x1xf32, #tpu.memory_space<vmem>>, vector<4x1xf32>
    %151 = vector.broadcast %150 : vector<4x1xf32> to vector<4x256xf32>
    %152 = arith.mulf %149, %151 : vector<4x256xf32>
    %c0_65 = arith.constant 0 : index
    %c0_66 = arith.constant 0 : index
    %153 = vector.load %arg11[%c0_65, %c0_66] : memref<4x1xf32, #tpu.memory_space<vmem>>, vector<4x1xf32>
    %154 = vector.broadcast %153 : vector<4x1xf32> to vector<4x256xf32>
    %155 = arith.addf %152, %154 : vector<4x256xf32>
    %cst_67 = arith.constant 0.000000e+00 : f32
    %156 = vector.broadcast %cst_67 : f32 to vector<4x256xf32>
    %157 = arith.maximumf %155, %156 : vector<4x256xf32>
    %158 = arith.truncf %157 : vector<4x256xf32> to vector<4x256xbf16>
    %c0_68 = arith.constant 0 : index
    %c0_69 = arith.constant 0 : index
    %c0_70 = arith.constant 0 : index
    %159 = vector.load %arg12[%c0_68, %c0_69, %c0_70] : memref<1x4x256xbf16, #tpu.memory_space<vmem>>, vector<1x4x256xbf16>
    %160 = vector.shape_cast %159 : vector<1x4x256xbf16> to vector<4x256xbf16>
    %161 = vector.shape_cast %158 : vector<4x256xbf16> to vector<1x4x256xbf16>
    tpu.vector_store %arg12[%c0_68, %c0_69, %c0_70], %161 {strides = array<i32>} : memref<1x4x256xbf16, #tpu.memory_space<vmem>>, vector<1x4x256xbf16>,
    return
  }
  func.func @transform_0(%arg0: i32) -> (i32, i32, i32) {
    %c0_i32 = arith.constant 0 : i32
    %c0_i32_0 = arith.constant 0 : i32
    %c0_i32_1 = arith.constant 0 : i32
    return %arg0, %c0_i32, %c0_i32_0 : i32, i32, i32
  }
  func.func @transform_1(%arg0: i32) -> (i32, i32, i32) {
    %c0_i32 = arith.constant 0 : i32
    %c0_i32_0 = arith.constant 0 : i32
    %c0_i32_1 = arith.constant 0 : i32
    return %arg0, %c0_i32, %c0_i32_0 : i32, i32, i32
  }
  func.func @transform_2(%arg0: i32) -> (i32, i32) {
    %c0_i32 = arith.constant 0 : i32
    %c0_i32_0 = arith.constant 0 : i32
    %c0_i32_1 = arith.constant 0 : i32
    return %c0_i32, %c0_i32_0 : i32, i32
  }
  func.func @transform_3(%arg0: i32) -> (i32, i32) {
    %c0_i32 = arith.constant 0 : i32
    %c0_i32_0 = arith.constant 0 : i32
    %c0_i32_1 = arith.constant 0 : i32
    return %c0_i32, %c0_i32_0 : i32, i32
  }
  func.func @transform_4(%arg0: i32) -> (i32, i32) {
    %c0_i32 = arith.constant 0 : i32
    %c0_i32_0 = arith.constant 0 : i32
    %c0_i32_1 = arith.constant 0 : i32
    return %c0_i32, %c0_i32_0 : i32, i32
  }
  func.func @transform_5(%arg0: i32) -> (i32, i32, i32) {
    %c0_i32 = arith.constant 0 : i32
    %c0_i32_0 = arith.constant 0 : i32
    %c0_i32_1 = arith.constant 0 : i32
    %c0_i32_2 = arith.constant 0 : i32
    return %c0_i32, %c0_i32_0, %c0_i32_1 : i32, i32, i32
  }
  func.func @transform_6(%arg0: i32) -> (i32, i32) {
    %c0_i32 = arith.constant 0 : i32
    %c0_i32_0 = arith.constant 0 : i32
    %c0_i32_1 = arith.constant 0 : i32
    return %c0_i32, %c0_i32_0 : i32, i32
  }
  func.func @transform_7(%arg0: i32) -> (i32, i32) {
    %c0_i32 = arith.constant 0 : i32
    %c0_i32_0 = arith.constant 0 : i32
    %c0_i32_1 = arith.constant 0 : i32
    return %c0_i32, %c0_i32_0 : i32, i32
  }
  func.func @transform_8(%arg0: i32) -> (i32, i32, i32) {
    %c0_i32 = arith.constant 0 : i32
    %c0_i32_0 = arith.constant 0 : i32
    %c0_i32_1 = arith.constant 0 : i32
    %c0_i32_2 = arith.constant 0 : i32
    return %c0_i32, %c0_i32_0, %c0_i32_1 : i32, i32, i32
  }
  func.func @transform_9(%arg0: i32) -> (i32, i32) {
    %c0_i32 = arith.constant 0 : i32
    %c0_i32_0 = arith.constant 0 : i32
    %c0_i32_1 = arith.constant 0 : i32
    return %c0_i32, %c0_i32_0 : i32, i32
  }
  func.func @transform_10(%arg0: i32) -> (i32, i32) {
    %c0_i32 = arith.constant 0 : i32
    %c0_i32_0 = arith.constant 0 : i32
    %c0_i32_1 = arith.constant 0 : i32
    return %c0_i32, %c0_i32_0 : i32, i32
  }
  func.func @transform_11(%arg0: i32) -> (i32, i32, i32) {
    %c0_i32 = arith.constant 0 : i32
    %c0_i32_0 = arith.constant 0 : i32
    %c0_i32_1 = arith.constant 0 : i32
    return %arg0, %c0_i32, %c0_i32_0 : i32, i32, i32
  }
}

</mosaic_0001>

<llo_original>
// kernel: tpu_custom_call.1
$region0: #{tpu_custom_call.1}
  #allocation0 [shape = 'u32[]', space=smem, size = 0x4, offset = 0x4, fixed_abs, tag = 'smem constant byte address 0x4 - core index']
  #allocation1 [shape = 'u32[72,128]{1,0:T(1,128)}', space=vmem, size = 0x9000, scoped, tag = 'internal scratch']
  %s0 = inlined_call_operand.vmem [shape: bf16[2,8,256], index: 0, kind: input, shape index: {}]
  %s1 = inlined_call_operand.hbm [shape: f32[2,4,256], index: 1, kind: input, shape index: {}]
  %s2 = inlined_call_operand.hbm [shape: bf16[6,256], index: 2, kind: input, shape index: {}]
  %s3 = inlined_call_operand.vmem [shape: bf16[16,8], index: 3, kind: input, shape index: {}]
  %s4 = inlined_call_operand.vmem [shape: f32[4,1], index: 4, kind: input, shape index: {}]
  %s5 = inlined_call_operand.vmem [shape: bf16[3,4,24], index: 5, kind: input, shape index: {}]
  %s6 = inlined_call_operand.vmem [shape: f32[4,1], index: 6, kind: input, shape index: {}]
  %s7 = inlined_call_operand.vmem [shape: f32[4,1], index: 7, kind: input, shape index: {}]
  %s8 = inlined_call_operand.vmem [shape: bf16[3,4,12], index: 8, kind: input, shape index: {}]
  %s9 = inlined_call_operand.vmem [shape: f32[4,1], index: 9, kind: input, shape index: {}]
  %s10 = inlined_call_operand.vmem [shape: f32[4,1], index: 10, kind: input, shape index: {}]
  %s11 = inlined_call_operand.hbm [shape: bf16[2,4,256], index: 11, kind: output, shape index: {}]
  %s12 = sld [smem:[#allocation0]]
  $region85: #{tpu_custom_call.1} parent=0
    _
  %s14 = ssub.s32 1, %s12
  %s15 = scalar_select 0, %s14, %s12
  $region1: #{tpu_custom_call.1} parent=0
    #allocation2 [shape = 'u8[8192]{0}', space=vmem, size = 0x2000, scoped, tag = 'input window, operand 1']
    #allocation3 [shape = 's32[2]{0}', space=sflag, size = 0x8, scoped, tag = 'scoped memory for tpu_custom_call.1']
    #allocation4 [shape = 's32[2]{0}', space=sflag, size = 0x8, scoped, tag = 'scoped memory for tpu_custom_call.1']
    #allocation5 [shape = 'u8[4096]{0}', space=vmem, size = 0x1000, scoped, tag = 'input window, operand 2, single buffered']
    #allocation6 [shape = 's32[1]{0}', space=sflag, size = 0x4, scoped, tag = 'scoped memory for tpu_custom_call.1']
    #allocation7 [shape = 'u8[4096]{0}', space=vmem, size = 0x1000, scoped, tag = 'output window, operand 0']
    %16 = vsyncpa [#allocation3], 0
    %s17 = scalar_lea.sflag [#allocation3], 1
    %18 = vsyncpa %s17, 0
    %19 = vsyncpa [#allocation6], 0
    %20 = vsyncpa [#allocation4], 0
    %s21 = scalar_lea.sflag [#allocation4], 1
    %22 = vsyncpa %s21, 0
    loop: start=0, step=1, limit=4
    $region2: #{tpu_custom_call.1} parent=1 // loop_pre_header
      _
    $region3: #{tpu_custom_call.1} parent=1 // loop_header
      %s24 = sphi 0, %s28
      %p25 = scmp.ge.s32.totalorder %s24, 4
      %s34 = sphi 0, %s36
      %s37 = sphi 0, %s34
      %s38 = sphi 0, %s37
      %s54 = sphi 0, %s38
      %s60 = sphi 0, %s62
      %s63 = sphi 0, %s60
      %s64 = sphi 0, %s63
      %s80 = sphi 0, %s64
      %s84 = sphi 0, %s84
      %s86 = sphi 0, %s84
      %s87 = sphi 0, %s86
      %s101 = sphi 0, %s87
      %s105 = sphi 0, %s105
      %s107 = sphi 0, %s105
      %s108 = sphi 0, %s107
      %s122 = sphi 0, %s108
      %s126 = sphi 0, %s126
      %s128 = sphi 0, %s126
      %s129 = sphi 0, %s128
      %s143 = sphi 0, %s129
      %s147 = sphi 0, %s147
      %s149 = sphi 0, %s147
      %s150 = sphi 0, %s149
      %s164 = sphi 0, %s150
      %s168 = sphi 0, %s168
      %s170 = sphi 0, %s168
      %s171 = sphi 0, %s170
      %s185 = sphi 0, %s171
      %s189 = sphi 0, %s189
      %s191 = sphi 0, %s189
      %s192 = sphi 0, %s191
      %s206 = sphi 0, %s192
      %s210 = sphi 0, %s210
      %s212 = sphi 0, %s210
      %s213 = sphi 0, %s212
      %s227 = sphi 0, %s213
      %s231 = sphi 0, %s231
      %s233 = sphi 0, %s231
      %s234 = sphi 0, %s233
      %s248 = sphi 0, %s234
      %s252 = sphi 0, %s252
      %s254 = sphi 0, %s252
      %s255 = sphi 0, %s254
      %s269 = sphi 0, %s255
      %s275 = sphi 0, %s277
      %s278 = sphi 0, %s275
      %s279 = sphi 0, %s278
      %s295 = sphi 0, %s279
    $region4: #{tpu_custom_call.1} parent=1 // loop_header_branch
      %27 = sbr.rel (%p25) target = $region8
    $region5: #{tpu_custom_call.1} parent=1 // loop_body
      %s29 = ssub.s32 %s24, 1
      %s30 = ssub.s32 %s24, 2
      %s31 = sadd.s32 %s24, 1
      %s32 = ssub.s32 %s24, %s31
      %p33 = scmp.eq.s32.totalorder %s32, 0
      %s35 = sadd.s32 %s34, 1
      %s36 = scalar_select %p33, %s34, %s35
      %p39 = pneg %p33
      %p40 = scmp.eq.s32.totalorder %s24, 1
      %p41 = por %p39, %p40
      %p42 = scmp.ne.s32.totalorder %s34, %s37
      %p43 = scmp.eq.s32.totalorder %s24, 0
      %p44 = por %p42, %p43
      %p45 = scmp.ne.s32.totalorder %s34, %s37
      %p46 = scmp.eq.s32.totalorder %s29, 1
      %p47 = por %p45, %p46
      %p48 = scmp.ne.s32.totalorder %s37, %s38
      %p49 = scmp.eq.s32.totalorder %s29, 0
      %p50 = por %p48, %p49
      %p51 = scmp.ne.s32.totalorder %s37, %s38
      %p52 = scmp.eq.s32.totalorder %s30, 1
      %p53 = por %p51, %p52
      %p55 = scmp.ne.s32.totalorder %s38, %s54
      %p56 = scmp.eq.s32.totalorder %s30, 0
      %p57 = por %p55, %p56
      %s58 = ssub.s32 %s24, %s31
      %p59 = scmp.eq.s32.totalorder %s58, 0
      %s61 = sadd.s32 %s60, 1
      %s62 = scalar_select %p59, %s60, %s61
      %p65 = pneg %p59
      %p66 = scmp.eq.s32.totalorder %s24, 1
      %p67 = por %p65, %p66
      %p68 = scmp.ne.s32.totalorder %s60, %s63
      %p69 = scmp.eq.s32.totalorder %s24, 0
      %p70 = por %p68, %p69
      %p71 = scmp.ne.s32.totalorder %s60, %s63
      %p72 = scmp.eq.s32.totalorder %s29, 1
      %p73 = por %p71, %p72
      %p74 = scmp.ne.s32.totalorder %s63, %s64
      %p75 = scmp.eq.s32.totalorder %s29, 0
      %p76 = por %p74, %p75
      %p77 = scmp.ne.s32.totalorder %s63, %s64
      %p78 = scmp.eq.s32.totalorder %s30, 1
      %p79 = por %p77, %p78
      %p81 = scmp.ne.s32.totalorder %s64, %s80
      %p82 = scmp.eq.s32.totalorder %s30, 0
      %p83 = por %p81, %p82
      %s85 = sadd.s32 %s84, 1
      %p88 = scmp.eq.s32.totalorder %s24, 1
      %p89 = scmp.ne.s32.totalorder %s84, %s86
      %p90 = scmp.eq.s32.totalorder %s24, 0
      %p91 = por %p89, %p90
      %p92 = scmp.ne.s32.totalorder %s84, %s86
      %p93 = scmp.eq.s32.totalorder %s29, 1
      %p94 = por %p92, %p93
      %p95 = scmp.ne.s32.totalorder %s86, %s87
      %p96 = scmp.eq.s32.totalorder %s29, 0
      %p97 = por %p95, %p96
      %p98 = scmp.ne.s32.totalorder %s86, %s87
      %p99 = scmp.eq.s32.totalorder %s30, 1
      %p100 = por %p98, %p99
      %p102 = scmp.ne.s32.totalorder %s87, %s101
      %p103 = scmp.eq.s32.totalorder %s30, 0
      %p104 = por %p102, %p103
      %s106 = sadd.s32 %s105, 1
      %p109 = scmp.eq.s32.totalorder %s24, 1
      %p110 = scmp.ne.s32.totalorder %s105, %s107
      %p111 = scmp.eq.s32.totalorder %s24, 0
      %p112 = por %p110, %p111
      %p113 = scmp.ne.s32.totalorder %s105, %s107
      %p114 = scmp.eq.s32.totalorder %s29, 1
      %p115 = por %p113, %p114
      %p116 = scmp.ne.s32.totalorder %s107, %s108
      %p117 = scmp.eq.s32.totalorder %s29, 0
      %p118 = por %p116, %p117
      %p119 = scmp.ne.s32.totalorder %s107, %s108
      %p120 = scmp.eq.s32.totalorder %s30, 1
      %p121 = por %p119, %p120
      %p123 = scmp.ne.s32.totalorder %s108, %s122
      %p124 = scmp.eq.s32.totalorder %s30, 0
      %p125 = por %p123, %p124
      %s127 = sadd.s32 %s126, 1
      %p130 = scmp.eq.s32.totalorder %s24, 1
      %p131 = scmp.ne.s32.totalorder %s126, %s128
      %p132 = scmp.eq.s32.totalorder %s24, 0
      %p133 = por %p131, %p132
      %p134 = scmp.ne.s32.totalorder %s126, %s128
      %p135 = scmp.eq.s32.totalorder %s29, 1
      %p136 = por %p134, %p135
      %p137 = scmp.ne.s32.totalorder %s128, %s129
      %p138 = scmp.eq.s32.totalorder %s29, 0
      %p139 = por %p137, %p138
      %p140 = scmp.ne.s32.totalorder %s128, %s129
      %p141 = scmp.eq.s32.totalorder %s30, 1
      %p142 = por %p140, %p141
      %p144 = scmp.ne.s32.totalorder %s129, %s143
      %p145 = scmp.eq.s32.totalorder %s30, 0
      %p146 = por %p144, %p145
      %s148 = sadd.s32 %s147, 1
      %p151 = scmp.eq.s32.totalorder %s24, 1
      %p152 = scmp.ne.s32.totalorder %s147, %s149
      %p153 = scmp.eq.s32.totalorder %s24, 0
      %p154 = por %p152, %p153
      %p155 = scmp.ne.s32.totalorder %s147, %s149
      %p156 = scmp.eq.s32.totalorder %s29, 1
      %p157 = por %p155, %p156
      %p158 = scmp.ne.s32.totalorder %s149, %s150
      %p159 = scmp.eq.s32.totalorder %s29, 0
      %p160 = por %p158, %p159
      %p161 = scmp.ne.s32.totalorder %s149, %s150
      %p162 = scmp.eq.s32.totalorder %s30, 1
      %p163 = por %p161, %p162
      %p165 = scmp.ne.s32.totalorder %s150, %s164
      %p166 = scmp.eq.s32.totalorder %s30, 0
      %p167 = por %p165, %p166
      %s169 = sadd.s32 %s168, 1
      %p172 = scmp.eq.s32.totalorder %s24, 1
      %p173 = scmp.ne.s32.totalorder %s168, %s170
      %p174 = scmp.eq.s32.totalorder %s24, 0
      %p175 = por %p173, %p174
      %p176 = scmp.ne.s32.totalorder %s168, %s170
      %p177 = scmp.eq.s32.totalorder %s29, 1
      %p178 = por %p176, %p177
      %p179 = scmp.ne.s32.totalorder %s170, %s171
      %p180 = scmp.eq.s32.totalorder %s29, 0
      %p181 = por %p179, %p180
      %p182 = scmp.ne.s32.totalorder %s170, %s171
      %p183 = scmp.eq.s32.totalorder %s30, 1
      %p184 = por %p182, %p183
      %p186 = scmp.ne.s32.totalorder %s171, %s185
      %p187 = scmp.eq.s32.totalorder %s30, 0
      %p188 = por %p186, %p187
      %s190 = sadd.s32 %s189, 1
      %p193 = scmp.eq.s32.totalorder %s24, 1
      %p194 = scmp.ne.s32.totalorder %s189, %s191
      %p195 = scmp.eq.s32.totalorder %s24, 0
      %p196 = por %p194, %p195
      %p197 = scmp.ne.s32.totalorder %s189, %s191
      %p198 = scmp.eq.s32.totalorder %s29, 1
      %p199 = por %p197, %p198
      %p200 = scmp.ne.s32.totalorder %s191, %s192
      %p201 = scmp.eq.s32.totalorder %s29, 0
      %p202 = por %p200, %p201
      %p203 = scmp.ne.s32.totalorder %s191, %s192
      %p204 = scmp.eq.s32.totalorder %s30, 1
      %p205 = por %p203, %p204
      %p207 = scmp.ne.s32.totalorder %s192, %s206
      %p208 = scmp.eq.s32.totalorder %s30, 0
      %p209 = por %p207, %p208
      %s211 = sadd.s32 %s210, 1
      %p214 = scmp.eq.s32.totalorder %s24, 1
      %p215 = scmp.ne.s32.totalorder %s210, %s212
      %p216 = scmp.eq.s32.totalorder %s24, 0
      %p217 = por %p215, %p216
      %p218 = scmp.ne.s32.totalorder %s210, %s212
      %p219 = scmp.eq.s32.totalorder %s29, 1
      %p220 = por %p218, %p219
      %p221 = scmp.ne.s32.totalorder %s212, %s213
      %p222 = scmp.eq.s32.totalorder %s29, 0
      %p223 = por %p221, %p222
      %p224 = scmp.ne.s32.totalorder %s212, %s213
      %p225 = scmp.eq.s32.totalorder %s30, 1
      %p226 = por %p224, %p225
      %p228 = scmp.ne.s32.totalorder %s213, %s227
      %p229 = scmp.eq.s32.totalorder %s30, 0
      %p230 = por %p228, %p229
      %s232 = sadd.s32 %s231, 1
      %p235 = scmp.eq.s32.totalorder %s24, 1
      %p236 = scmp.ne.s32.totalorder %s231, %s233
      %p237 = scmp.eq.s32.totalorder %s24, 0
      %p238 = por %p236, %p237
      %p239 = scmp.ne.s32.totalorder %s231, %s233
      %p240 = scmp.eq.s32.totalorder %s29, 1
      %p241 = por %p239, %p240
      %p242 = scmp.ne.s32.totalorder %s233, %s234
      %p243 = scmp.eq.s32.totalorder %s29, 0
      %p244 = por %p242, %p243
      %p245 = scmp.ne.s32.totalorder %s233, %s234
      %p246 = scmp.eq.s32.totalorder %s30, 1
      %p247 = por %p245, %p246
      %p249 = scmp.ne.s32.totalorder %s234, %s248
      %p250 = scmp.eq.s32.totalorder %s30, 0
      %p251 = por %p249, %p250
      %s253 = sadd.s32 %s252, 1
      %p256 = scmp.eq.s32.totalorder %s24, 1
      %p257 = scmp.ne.s32.totalorder %s252, %s254
      %p258 = scmp.eq.s32.totalorder %s24, 0
      %p259 = por %p257, %p258
      %p260 = scmp.ne.s32.totalorder %s252, %s254
      %p261 = scmp.eq.s32.totalorder %s29, 1
      %p262 = por %p260, %p261
      %p263 = scmp.ne.s32.totalorder %s254, %s255
      %p264 = scmp.eq.s32.totalorder %s29, 0
      %p265 = por %p263, %p264
      %p266 = scmp.ne.s32.totalorder %s254, %s255
      %p267 = scmp.eq.s32.totalorder %s30, 1
      %p268 = por %p266, %p267
      %p270 = scmp.ne.s32.totalorder %s255, %s269
      %p271 = scmp.eq.s32.totalorder %s30, 0
      %p272 = por %p270, %p271
      %s273 = ssub.s32 %s24, %s31
      %p274 = scmp.eq.s32.totalorder %s273, 0
      %s276 = sadd.s32 %s275, 1
      %s277 = scalar_select %p274, %s275, %s276
      %p280 = pneg %p274
      %p281 = scmp.eq.s32.totalorder %s24, 1
      %p282 = por %p280, %p281
      %p283 = scmp.ne.s32.totalorder %s275, %s278
      %p284 = scmp.eq.s32.totalorder %s24, 0
      %p285 = por %p283, %p284
      %p286 = scmp.ne.s32.totalorder %s275, %s278
      %p287 = scmp.eq.s32.totalorder %s29, 1
      %p288 = por %p286, %p287
      %p289 = scmp.ne.s32.totalorder %s278, %s279
      %p290 = scmp.eq.s32.totalorder %s29, 0
      %p291 = por %p289, %p290
      %p292 = scmp.ne.s32.totalorder %s278, %s279
      %p293 = scmp.eq.s32.totalorder %s30, 1
      %p294 = por %p292, %p293
      %p296 = scmp.ne.s32.totalorder %s279, %s295
      %p297 = scmp.eq.s32.totalorder %s30, 0
      %p298 = por %p296, %p297
      %p299 = scmp.le.s32.totalorder 1, %s24
      %p300 = scmp.lt.s32.totalorder %s24, 3
      %p301 = pnand %p299, %p300
      %p302 = pneg %p301
      // Predicated region
      $region9: #{tpu_custom_call.1} parent=5 // pred_check
        _
      $region10: #{tpu_custom_call.1} parent=5 // pred_check_branch
        %304 = sbr.rel (%p301) target = $region12
      $region11: #{tpu_custom_call.1} parent=5 // pred_region
        %s305 = ssub.s32 %s24, 1
        // Predicated region
        $region13: #{tpu_custom_call.1} parent=11 // pred_check
          %p306 = pneg %p97
        $region14: #{tpu_custom_call.1} parent=11 // pred_check_branch
          %308 = sbr.rel (%p306) target = $region16
        $region15: #{tpu_custom_call.1} parent=11 // pred_region
          %310 = vsyncadd [#allocation6], 0
          %s312 = sshll.u32 %s2, 4
          %s313 = int_to_ptr.hbm [resolvable:$true] %s312
          %s314 = sshll.u32 [#allocation5], 4
          %s315 = int_to_ptr.vmem [resolvable:$true] %s314
          %317 = dma.hbm_to_vmem [thread:$0]  %s313, 128, %s315, [#allocation6]
        $region16: #{tpu_custom_call.1} parent=11 // pred_fallthru
          _
        // Predicated region
        $region17: #{tpu_custom_call.1} parent=11 // pred_check
          %p318 = pneg %p118
        $region18: #{tpu_custom_call.1} parent=11 // pred_check_branch
          %320 = sbr.rel (%p318) target = $region20
        $region19: #{tpu_custom_call.1} parent=11 // pred_region
          _
        $region20: #{tpu_custom_call.1} parent=11 // pred_fallthru
          _
        // Predicated region
        $region21: #{tpu_custom_call.1} parent=11 // pred_check
          %p321 = pneg %p139
        $region22: #{tpu_custom_call.1} parent=11 // pred_check_branch
          %323 = sbr.rel (%p321) target = $region24
        $region23: #{tpu_custom_call.1} parent=11 // pred_region
          _
        $region24: #{tpu_custom_call.1} parent=11 // pred_fallthru
          _
        // Predicated region
        $region25: #{tpu_custom_call.1} parent=11 // pred_check
          %p324 = pneg %p160
        $region26: #{tpu_custom_call.1} parent=11 // pred_check_branch
          %326 = sbr.rel (%p324) target = $region28
        $region27: #{tpu_custom_call.1} parent=11 // pred_region
          _
        $region28: #{tpu_custom_call.1} parent=11 // pred_fallthru
          _
        // Predicated region
        $region29: #{tpu_custom_call.1} parent=11 // pred_check
          %p327 = pneg %p181
        $region30: #{tpu_custom_call.1} parent=11 // pred_check_branch
          %329 = sbr.rel (%p327) target = $region32
        $region31: #{tpu_custom_call.1} parent=11 // pred_region
          _
        $region32: #{tpu_custom_call.1} parent=11 // pred_fallthru
          _
        // Predicated region
        $region33: #{tpu_custom_call.1} parent=11 // pred_check
          %p330 = pneg %p202
        $region34: #{tpu_custom_call.1} parent=11 // pred_check_branch
          %332 = sbr.rel (%p330) target = $region36
        $region35: #{tpu_custom_call.1} parent=11 // pred_region
          _
        $region36: #{tpu_custom_call.1} parent=11 // pred_fallthru
          _
        // Predicated region
        $region37: #{tpu_custom_call.1} parent=11 // pred_check
          %p333 = pneg %p223
        $region38: #{tpu_custom_call.1} parent=11 // pred_check_branch
          %335 = sbr.rel (%p333) target = $region40
        $region39: #{tpu_custom_call.1} parent=11 // pred_region
          _
        $region40: #{tpu_custom_call.1} parent=11 // pred_fallthru
          _
        // Predicated region
        $region41: #{tpu_custom_call.1} parent=11 // pred_check
          %p336 = pneg %p244
        $region42: #{tpu_custom_call.1} parent=11 // pred_check_branch
          %338 = sbr.rel (%p336) target = $region44
        $region43: #{tpu_custom_call.1} parent=11 // pred_region
          _
        $region44: #{tpu_custom_call.1} parent=11 // pred_fallthru
          _
        // Predicated region
        $region45: #{tpu_custom_call.1} parent=11 // pred_check
          %p339 = pneg %p265
        $region46: #{tpu_custom_call.1} parent=11 // pred_check_branch
          %341 = sbr.rel (%p339) target = $region48
        $region47: #{tpu_custom_call.1} parent=11 // pred_region
          _
        $region48: #{tpu_custom_call.1} parent=11 // pred_fallthru
          _
      $region12: #{tpu_custom_call.1} parent=5 // pred_fallthru
        _
      %p342 = scmp.lt.s32.totalorder %s24, 2
      // Predicated region
      $region49: #{tpu_custom_call.1} parent=5 // pred_check
        %p343 = pneg %p342
      $region50: #{tpu_custom_call.1} parent=5 // pred_check_branch
        %345 = sbr.rel (%p343) target = $region52
      $region51: #{tpu_custom_call.1} parent=5 // pred_region
        // Predicated region
        $region53: #{tpu_custom_call.1} parent=51 // pred_check
          %p346 = pneg %p44
        $region54: #{tpu_custom_call.1} parent=51 // pred_check_branch
          %348 = sbr.rel (%p346) target = $region56
        $region55: #{tpu_custom_call.1} parent=51 // pred_region
          %p349 = scmp.lt.s32.totalorder %s24, 1
          %s350 = scalar_select %p349, %s24, 1
          %s351 = smul.addr %s350, 2
          %s352 = smul.addr %s351, 4
          %s353 = scalar_lea.vmem %s0, %s352
        $region56: #{tpu_custom_call.1} parent=51 // pred_fallthru
          _
        // Predicated region
        $region57: #{tpu_custom_call.1} parent=51 // pred_check
          %p354 = pneg %p70
        $region58: #{tpu_custom_call.1} parent=51 // pred_check_branch
          %356 = sbr.rel (%p354) target = $region60
        $region59: #{tpu_custom_call.1} parent=51 // pred_region
          %s357 = sand.u32 %s60, 1
          %s358 = scalar_lea.sflag [#allocation3], %s357
          %s359 = sand.u32 %s60, 1
          %s360 = smul.addr %s359, 8
          %s361 = scalar_lea.vmem [#allocation2], %s360
          %363 = vsyncadd %s358, 0
          %s364 = smul.addr %s24, 2
          %s365 = smul.addr %s364, 4
          %s366 = scalar_lea.hbm %s1, %s365
          %s368 = sshll.u32 %s366, 4
          %s369 = int_to_ptr.hbm [resolvable:$true] %s368
          %s370 = sshll.u32 %s361, 4
          %s371 = int_to_ptr.vmem [resolvable:$true] %s370
          %373 = dma.hbm_to_vmem [thread:$0]  %s369, 128, %s371, %s358
        $region60: #{tpu_custom_call.1} parent=51 // pred_fallthru
          _
      $region52: #{tpu_custom_call.1} parent=5 // pred_fallthru
        _
      %p374 = scmp.le.s32.totalorder 1, %s24
      %p375 = scmp.lt.s32.totalorder %s24, 3
      %p376 = pnand %p374, %p375
      %p377 = pneg %p376
      // Predicated region
      $region61: #{tpu_custom_call.1} parent=5 // pred_check
        _
      $region62: #{tpu_custom_call.1} parent=5 // pred_check_branch
        %379 = sbr.rel (%p376) target = $region64
      $region63: #{tpu_custom_call.1} parent=5 // pred_region
        %s380 = ssub.s32 %s24, 1
        %s381 = sand.u32 %s63, 1
        %s382 = scalar_lea.sflag [#allocation3], %s381
        %s383 = sand.u32 %s63, 1
        %s384 = smul.addr %s383, 8
        %s385 = scalar_lea.vmem [#allocation2], %s384
        // Predicated region
        $region65: #{tpu_custom_call.1} parent=63 // pred_check
          %p386 = pneg %p76
        $region66: #{tpu_custom_call.1} parent=63 // pred_check_branch
          %388 = sbr.rel (%p386) target = $region68
        $region67: #{tpu_custom_call.1} parent=63 // pred_region
          %390 = dma.done %s382, 128
        $region68: #{tpu_custom_call.1} parent=63 // pred_fallthru
          _
        // Predicated region
        $region69: #{tpu_custom_call.1} parent=63 // pred_check
          %p391 = pneg %p97
        $region70: #{tpu_custom_call.1} parent=63 // pred_check_branch
          %393 = sbr.rel (%p391) target = $region72
        $region71: #{tpu_custom_call.1} parent=63 // pred_region
          %395 = dma.done [#allocation6], 128
        $region72: #{tpu_custom_call.1} parent=63 // pred_fallthru
          _
        %p396 = scmp.lt.s32.totalorder %s29, 1
        %s397 = scalar_select %p396, %s29, 1
        %s398 = smul.addr %s397, 2
        %s399 = smul.addr %s398, 4
        %s400 = scalar_lea.vmem %s0, %s399
        %p401 = pneg %p50
        %p402 = pneg %p47
        %s403 = sand.u32 %s63, 1
        %s404 = scalar_lea.sflag [#allocation3], %s403
        %s405 = sand.u32 %s63, 1
        %s406 = smul.addr %s405, 8
        %s407 = scalar_lea.vmem [#allocation2], %s406
        %p408 = pneg %p76
        %p409 = pneg %p73
        %p410 = pneg %p97
        %p411 = pneg %p94
        %p412 = pneg %p118
        %p413 = pneg %p115
        %p414 = pneg %p139
        %p415 = pneg %p136
        %p416 = pneg %p160
        %p417 = pneg %p157
        %p418 = pneg %p181
        %p419 = pneg %p178
        %p420 = pneg %p202
        %p421 = pneg %p199
        %p422 = pneg %p223
        %p423 = pneg %p220
        %p424 = pneg %p244
        %p425 = pneg %p241
        %p426 = pneg %p265
        %p427 = pneg %p262
        %p428 = pneg %p291
        %p429 = pneg %p288
        %s430 = sand.u32 %s278, 1
        %s431 = scalar_lea.sflag [#allocation4], %s430
        %s432 = sand.u32 %s278, 1
        %s433 = smul.addr %s432, 4
        %s434 = scalar_lea.vmem [#allocation7], %s433
        %p435 = scmp.lt.s32.totalorder %s29, 1
        %s436 = scalar_select %p435, %s29, 1
        %s437 = smul.addr %s436, 2
        %s438 = smul.addr %s437, 4
        %s439 = scalar_lea.vmem %s0, %s438
        %v441 = vld [vmem:[#allocation5] sm:$0x11]
        %v442 = vld [vmem:[%s3] sm:$0xf]
        %v443 = vld [vmem:[%s3 + $0x4] sm:$0xf]
        %v444 = vld [vmem:[%s439] sm:$0xff]
        %v447 = vunpack.c.l.b16 %v442
        %v448 = vunpack.c.l.b16 %v443
        %v449 = vpack.c.b16 %v448, %v447
        %v451 = vunpack.c.l.b16 %v444
        %v452 = vunpack.c.h.b16 %v444
        %v453 = vpack.c.b16 %v451, %v451
        %v454 = vpack.c.b16 %v452, %v452
        %vm455 = vcmask 64512
        %v457 = vsel %vm455, %v449, 0
        %vm459 = vcmask 1043456
        %v461 = vsel %vm459, %v453, 0
        %v464 = vsel %vm459, %v454, 0
        %466 = vmatpush.bf16.msra.mxu0 0
        %467 = vmatpush.bf16.msra.mxu0 0
        %468 = vmatpush.bf16.msra.mxu0 0
        %469 = vmatpush.bf16.msra.mxu0 0
        %470 = vmatpush.bf16.msra.mxu0 0
        %471 = vmatpush.bf16.msra.mxu0 0
        %472 = vmatpush.bf16.msra.mxu0 0
        %473 = vmatpush.bf16.msra.mxu0 %v461
        %474 = vmatmul.bf16.gmra.mxu0 %v457
        %v475 = vpop.f32.mrf.mxu0
        %v476 = vadd.f32 0.0, %v475
        %v477 = vpop.f32.mrf.mxu0
        %v478 = vadd.f32 0.0, %v477
        %479 = vdwg.mxu0
        %480 = vmatpush.bf16.msra.mxu0 0
        %481 = vmatpush.bf16.msra.mxu0 0
        %482 = vmatpush.bf16.msra.mxu0 0
        %483 = vmatpush.bf16.msra.mxu0 0
        %484 = vmatpush.bf16.msra.mxu0 0
        %485 = vmatpush.bf16.msra.mxu0 0
        %486 = vmatpush.bf16.msra.mxu0 0
        %487 = vmatpush.bf16.msra.mxu0 %v464
        %488 = vmatmul.bf16.gmra.mxu0 %v457
        %v489 = vpop.f32.mrf.mxu0
        %v490 = vadd.f32 0.0, %v489
        %v491 = vpop.f32.mrf.mxu0
        %v492 = vadd.f32 0.0, %v491
        %493 = vdwg.mxu0
        %v494 = vld [vmem:[#allocation5] sm:$0x22]
        %v495 = vunpack.c.l.bf16 %v494
        %v496 = vunpack.c.h.bf16 %v494
        %v497 = vperm.slane %v495, 2
        %v498 = vperm.slane %v496, 2
        %v499 = vmul.f32 %v497, %v476
        %v500 = vmul.f32 %v498, %v490
        %v501 = vperm.slane %v495, 3
        %v502 = vperm.slane %v496, 3
        %v503 = vmul.f32 %v501, %v476
        %v504 = vmul.f32 %v502, %v490
        %v507 = vrot.slane %v503, 4
        %v508 = vrot.slane %v504, 4
        %v511 = vadd.f32 %v499, %v507
        %v512 = vadd.f32 %v500, %v508
        %v513 = vld [vmem:[#allocation5] sm:$0x44]
        %v514 = vunpack.c.l.bf16 %v513
        %v515 = vunpack.c.h.bf16 %v513
        %v516 = vperm.slane %v514, 4
        %v517 = vperm.slane %v515, 4
        %v518 = vmul.f32 %v516, %v478
        %v519 = vmul.f32 %v517, %v492
        %v520 = vadd.f32 %v511, %v518
        %v521 = vadd.f32 %v512, %v519
        %v522 = vperm.slane %v514, 5
        %v523 = vperm.slane %v515, 5
        %v524 = vmul.f32 %v522, %v478
        %v525 = vmul.f32 %v523, %v492
        %v528 = vrot.slane %v524, 4
        %v529 = vrot.slane %v525, 4
        %v532 = vadd.f32 %v520, %v528
        %v533 = vadd.f32 %v521, %v529
        %v534 = vld [vmem:[%s4] sm:$0xf]
        %536 = vset.pattern.permute.xlu0 0
        %537 = vperm.xlu0 %536, %v534
        %v538 = vpop.permute.xlu0 %537
        %v540 = vadd.f32 %v532, %v538
        %v541 = vadd.f32 %v533, %v538
        %v542 = vld [vmem:[%s385] sm:$0xff]
        %544 = vst [vmem:[#allocation1] ss:$2 sm:$0xff] %v542
        %v545 = vld.sshfl [vmem:[#allocation1] sm:$0xff pattern:$0x75316420]
        %v546 = vld.sshfl [vmem:[#allocation1 + $0x8] sm:$0xff pattern:$0x75316420]
        %v549 = vpack.c.bf16 %v546, %v545
        %v550 = vpack.c.bf16 %v541, %v540
        %v552 = vunpack.c.l.b16 %v549
        %v553 = vunpack.c.h.b16 %v549
        %v554 = vpack.c.b16 %v552, %v552
        %v555 = vpack.c.b16 %v553, %v553
        %v557 = vunpack.c.l.b16 %v550
        %v558 = vunpack.c.h.b16 %v550
        %v559 = vpack.c.b16 %v557, %v557
        %v560 = vpack.c.b16 %v558, %v558
        %v561 = vrot.slane %v559, 6
        %v562 = vrot.slane %v560, 6
        %vm563 = vcmask 1041408
        %v566 = vsel %vm563, %v554, %v561
        %v569 = vsel %vm563, %v555, %v562
        %572 = vrot.lane.b32.xlu0 %v566, 16
        %v573 = vpop.permute.xlu0 %572
        %574 = vrot.lane.b32.xlu0 %v569, 16
        %v575 = vpop.permute.xlu0 %574
        %vm576 = vcmask 130048
        %v577 = vsel %vm576, %v573, %v575
        %vm578 = vcmask 130048
        %v581 = vsel %vm578, 0, %v573
        %583 = vrot.lane.b32.xlu0 %v581, 1
        %v584 = vpop.permute.xlu0 %583
        %585 = vrot.lane.b32.xlu0 %v577, 1
        %v586 = vpop.permute.xlu0 %585
        %vm587 = vcmask 7168
        %v588 = vsel %vm587, %v584, %v586
        %vm590 = vcmask 7168
        %v592 = vsel %vm590, 0, %v584
        %v595 = vunpack.c.l.b16 %v441
        %v596 = vunpack.c.h.b16 %v441
        %v597 = vpack.c.b16 %v595, %v595
        %v598 = vpack.c.b16 %v596, %v596
        %v600 = vpack.i.b16 %v597, %v597
        %v602 = vperm.slane %v600, 0
        %v604 = vpack.i.b16 %v598, %v598
        %v606 = vperm.slane %v604, 0
        %v607 = vunpack.c.l.bf16 %v592
        %v608 = vunpack.c.l.bf16 %v588
        %v609 = vunpack.c.l.bf16 %v602
        %v610 = vunpack.c.l.bf16 %v606
        %v611 = vmul.f32 %v607, %v609
        %v612 = vmul.f32 %v608, %v610
        %v613 = vpack.c.bf16 %v612, %v611
        %614 = vrot.lane.b32.xlu0 %v581, 127
        %v615 = vpop.permute.xlu0 %614
        %616 = vrot.lane.b32.xlu0 %v577, 127
        %v617 = vpop.permute.xlu0 %616
        %vm618 = vcmask 1039360
        %v619 = vsel %vm618, %v615, %v617
        %vm621 = vcmask 1039360
        %v623 = vsel %vm621, %v617, 0
        %v625 = vshrl.u32 %v597, 16
        %v626 = vpack.i.b16 %v625, %v625
        %v628 = vperm.slane %v626, 0
        %v629 = vshrl.u32 %v598, 16
        %v630 = vpack.i.b16 %v629, %v629
        %v632 = vperm.slane %v630, 0
        %v633 = vunpack.c.l.bf16 %v619
        %v634 = vunpack.c.l.bf16 %v623
        %v635 = vunpack.c.l.bf16 %v628
        %v636 = vunpack.c.l.bf16 %v632
        %v637 = vmul.f32 %v633, %v635
        %v638 = vmul.f32 %v634, %v636
        %v639 = vpack.c.bf16 %v638, %v637
        %v641 = vunpack.c.l.b16 %v613
        %v642 = vunpack.c.h.b16 %v613
        %v643 = vpack.c.b16 %v641, %v641
        %v644 = vpack.c.b16 %v642, %v642
        %v645 = vrot.slane %v581, 4
        %v646 = vrot.slane %v577, 4
        %v648 = vunpack.c.l.b16 %v639
        %v649 = vunpack.c.h.b16 %v639
        %v650 = vpack.c.b16 %v648, %v648
        %v651 = vpack.c.b16 %v649, %v649
        %v654 = vsel %vm459, %v643, %v645
        %v658 = vsel %vm459, %v644, %v646
        %v660 = vld [vmem:[%s5] sm:$0x3]
        %661 = vrot.lane.b32.xlu0 %v566, 1
        %v662 = vpop.permute.xlu0 %661
        %663 = vrot.lane.b32.xlu0 %v569, 1
        %v664 = vpop.permute.xlu0 %663
        %v665 = vsel %vm587, %v662, %v664
        %v668 = vsel %vm590, 0, %v662
        %v670 = vunpack.c.l.bf16 %v668
        %v671 = vunpack.c.l.bf16 %v665
        %v672 = vmul.f32 %v670, %v609
        %v673 = vmul.f32 %v671, %v610
        %v674 = vpack.c.bf16 %v673, %v672
        %675 = vrot.lane.b32.xlu0 %v566, 127
        %v676 = vpop.permute.xlu0 %675
        %677 = vrot.lane.b32.xlu0 %v569, 127
        %v678 = vpop.permute.xlu0 %677
        %v679 = vsel %vm618, %v676, %v678
        %v682 = vsel %vm621, %v678, 0
        %v684 = vunpack.c.l.bf16 %v679
        %v685 = vunpack.c.l.bf16 %v682
        %v686 = vmul.f32 %v684, %v635
        %v687 = vmul.f32 %v685, %v636
        %v688 = vpack.c.bf16 %v687, %v686
        %v690 = vunpack.c.l.b16 %v674
        %v691 = vunpack.c.h.b16 %v674
        %v692 = vpack.c.b16 %v690, %v690
        %v693 = vpack.c.b16 %v691, %v691
        %v694 = vrot.slane %v566, 4
        %v695 = vrot.slane %v569, 4
        %v697 = vunpack.c.l.b16 %v688
        %v698 = vunpack.c.h.b16 %v688
        %v699 = vpack.c.b16 %v697, %v697
        %v700 = vpack.c.b16 %v698, %v698
        %v703 = vsel %vm459, %v692, %v694
        %v707 = vsel %vm459, %v693, %v695
        %s709 = scalar_lea.vmem %s5, 2
        %v710 = vld [vmem:[%s709] sm:$0x3]
        %vm711 = vcmask 195584
        %v713 = vsel %vm711, %v710, 0
        %v716 = vsel %vm459, %v699, 0
        %v719 = vsel %vm459, %v700, 0
        %721 = vmatpush.bf16.msra.mxu0 0
        %722 = vmatpush.bf16.msra.mxu0 0
        %723 = vmatpush.bf16.msra.mxu0 0
        %724 = vmatpush.bf16.msra.mxu0 0
        %725 = vmatpush.bf16.msra.mxu0 0
        %726 = vmatpush.bf16.msra.mxu0 0
        %727 = vmatpush.bf16.msra.mxu0 %v716
        %728 = vmatpush.bf16.msra.mxu0 %v703
        %729 = vmatmul.bf16.gmra.mxu0 %v713
        %v730 = vpop.f32.mrf.mxu0
        %v731 = vadd.f32 0.0, %v730
        %v732 = vpop.f32.mrf.mxu0
        %733 = vdwg.mxu0
        %734 = vmatpush.bf16.msra.mxu0 0
        %735 = vmatpush.bf16.msra.mxu0 0
        %736 = vmatpush.bf16.msra.mxu0 0
        %737 = vmatpush.bf16.msra.mxu0 0
        %738 = vmatpush.bf16.msra.mxu0 0
        %739 = vmatpush.bf16.msra.mxu0 0
        %740 = vmatpush.bf16.msra.mxu0 %v719
        %741 = vmatpush.bf16.msra.mxu0 %v707
        %742 = vmatmul.bf16.gmra.mxu0 %v713
        %v743 = vpop.f32.mrf.mxu0
        %v744 = vadd.f32 0.0, %v743
        %v745 = vpop.f32.mrf.mxu0
        %746 = vdwg.mxu0
        %v748 = vsel %vm711, %v660, 0
        %v751 = vsel %vm459, %v650, 0
        %v754 = vsel %vm459, %v651, 0
        %756 = vmatpush.bf16.msra.mxu0 0
        %757 = vmatpush.bf16.msra.mxu0 0
        %758 = vmatpush.bf16.msra.mxu0 0
        %759 = vmatpush.bf16.msra.mxu0 0
        %760 = vmatpush.bf16.msra.mxu0 0
        %761 = vmatpush.bf16.msra.mxu0 0
        %762 = vmatpush.bf16.msra.mxu0 %v751
        %763 = vmatpush.bf16.msra.mxu0 %v654
        %764 = vmatmul.bf16.gmra.mxu0 %v748
        %v765 = vpop.f32.mrf.mxu0
        %v766 = vadd.f32 %v731, %v765
        %v767 = vpop.f32.mrf.mxu0
        %768 = vdwg.mxu0
        %769 = vmatpush.bf16.msra.mxu0 0
        %770 = vmatpush.bf16.msra.mxu0 0
        %771 = vmatpush.bf16.msra.mxu0 0
        %772 = vmatpush.bf16.msra.mxu0 0
        %773 = vmatpush.bf16.msra.mxu0 0
        %774 = vmatpush.bf16.msra.mxu0 0
        %775 = vmatpush.bf16.msra.mxu0 %v754
        %776 = vmatpush.bf16.msra.mxu0 %v658
        %777 = vmatmul.bf16.gmra.mxu0 %v748
        %v778 = vpop.f32.mrf.mxu0
        %v779 = vadd.f32 %v744, %v778
        %v780 = vpop.f32.mrf.mxu0
        %781 = vdwg.mxu0
        %782 = vrot.lane.b32.xlu0 %v566, 112
        %v783 = vpop.permute.xlu0 %782
        %784 = vrot.lane.b32.xlu0 %v569, 112
        %v785 = vpop.permute.xlu0 %784
        %vm786 = vcmask 916480
        %v787 = vsel %vm786, %v783, %v785
        %vm788 = vcmask 916480
        %v790 = vsel %vm788, %v785, 0
        %792 = vrot.lane.b32.xlu0 %v787, 1
        %v793 = vpop.permute.xlu0 %792
        %794 = vrot.lane.b32.xlu0 %v790, 1
        %v795 = vpop.permute.xlu0 %794
        %v796 = vsel %vm587, %v793, %v795
        %v799 = vsel %vm590, 0, %v793
        %v801 = vunpack.c.l.bf16 %v799
        %v802 = vunpack.c.l.bf16 %v796
        %v803 = vmul.f32 %v801, %v609
        %v804 = vmul.f32 %v802, %v610
        %v805 = vpack.c.bf16 %v804, %v803
        %806 = vrot.lane.b32.xlu0 %v787, 127
        %v807 = vpop.permute.xlu0 %806
        %808 = vrot.lane.b32.xlu0 %v790, 127
        %v809 = vpop.permute.xlu0 %808
        %v810 = vsel %vm618, %v807, %v809
        %v813 = vsel %vm621, %v809, 0
        %v815 = vunpack.c.l.bf16 %v810
        %v816 = vunpack.c.l.bf16 %v813
        %v817 = vmul.f32 %v815, %v635
        %v818 = vmul.f32 %v816, %v636
        %v819 = vpack.c.bf16 %v818, %v817
        %v821 = vunpack.c.l.b16 %v805
        %v822 = vunpack.c.h.b16 %v805
        %v823 = vpack.c.b16 %v821, %v821
        %v824 = vpack.c.b16 %v822, %v822
        %v825 = vrot.slane %v787, 4
        %v826 = vrot.slane %v790, 4
        %v828 = vunpack.c.l.b16 %v819
        %v829 = vunpack.c.h.b16 %v819
        %v830 = vpack.c.b16 %v828, %v828
        %v831 = vpack.c.b16 %v829, %v829
        %v834 = vsel %vm459, %v823, %v825
        %v838 = vsel %vm459, %v824, %v826
        %s840 = scalar_lea.vmem %s5, 4
        %v841 = vld [vmem:[%s840] sm:$0x3]
        %v843 = vsel %vm711, %v841, 0
        %v846 = vsel %vm459, %v830, 0
        %v849 = vsel %vm459, %v831, 0
        %851 = vmatpush.bf16.msra.mxu0 0
        %852 = vmatpush.bf16.msra.mxu0 0
        %853 = vmatpush.bf16.msra.mxu0 0
        %854 = vmatpush.bf16.msra.mxu0 0
        %855 = vmatpush.bf16.msra.mxu0 0
        %856 = vmatpush.bf16.msra.mxu0 0
        %857 = vmatpush.bf16.msra.mxu0 %v846
        %858 = vmatpush.bf16.msra.mxu0 %v834
        %859 = vmatmul.bf16.gmra.mxu0 %v843
        %v860 = vpop.f32.mrf.mxu0
        %v861 = vadd.f32 0.0, %v860
        %v862 = vpop.f32.mrf.mxu0
        %863 = vdwg.mxu0
        %864 = vmatpush.bf16.msra.mxu0 0
        %865 = vmatpush.bf16.msra.mxu0 0
        %866 = vmatpush.bf16.msra.mxu0 0
        %867 = vmatpush.bf16.msra.mxu0 0
        %868 = vmatpush.bf16.msra.mxu0 0
        %869 = vmatpush.bf16.msra.mxu0 0
        %870 = vmatpush.bf16.msra.mxu0 %v849
        %871 = vmatpush.bf16.msra.mxu0 %v838
        %872 = vmatmul.bf16.gmra.mxu0 %v843
        %v873 = vpop.f32.mrf.mxu0
        %v874 = vadd.f32 0.0, %v873
        %v875 = vpop.f32.mrf.mxu0
        %876 = vdwg.mxu0
        %v877 = vadd.f32 %v766, %v861
        %v878 = vadd.f32 %v779, %v874
        %v879 = vld [vmem:[%s6] sm:$0xf]
        %881 = vset.pattern.permute.xlu0 0
        %882 = vperm.xlu0 %881, %v879
        %v883 = vpop.permute.xlu0 %882
        %v885 = vmul.f32 %v877, %v883
        %v886 = vmul.f32 %v878, %v883
        %v887 = vld [vmem:[%s7] sm:$0xf]
        %889 = vset.pattern.permute.xlu0 0
        %890 = vperm.xlu0 %889, %v887
        %v891 = vpop.permute.xlu0 %890
        %v893 = vadd.f32 %v885, %v891
        %v894 = vadd.f32 %v886, %v891
        %v895 = vmax.f32 %v893, 0.0
        %v896 = vmax.f32 %v894, 0.0
        %v897 = vpack.c.bf16 %v896, %v895
        %v899 = vunpack.c.l.b16 %v897
        %v900 = vunpack.c.h.b16 %v897
        %v901 = vpack.c.b16 %v899, %v899
        %v902 = vpack.c.b16 %v900, %v900
        %903 = vrot.lane.b32.xlu0 %v901, 16
        %v904 = vpop.permute.xlu0 %903
        %905 = vrot.lane.b32.xlu0 %v902, 16
        %v906 = vpop.permute.xlu0 %905
        %v907 = vsel %vm576, %v904, %v906
        %v909 = vsel %vm578, 0, %v904
        %911 = vrot.lane.b32.xlu0 %v909, 1
        %v912 = vpop.permute.xlu0 %911
        %913 = vrot.lane.b32.xlu0 %v907, 1
        %v914 = vpop.permute.xlu0 %913
        %v915 = vsel %vm587, %v912, %v914
        %v918 = vsel %vm590, 0, %v912
        %v920 = vunpack.c.l.bf16 %v918
        %v921 = vunpack.c.l.bf16 %v915
        %v922 = vmul.f32 %v920, %v609
        %v923 = vmul.f32 %v921, %v610
        %v924 = vpack.c.bf16 %v923, %v922
        %925 = vrot.lane.b32.xlu0 %v909, 127
        %v926 = vpop.permute.xlu0 %925
        %927 = vrot.lane.b32.xlu0 %v907, 127
        %v928 = vpop.permute.xlu0 %927
        %v929 = vsel %vm618, %v926, %v928
        %v932 = vsel %vm621, %v928, 0
        %v934 = vunpack.c.l.bf16 %v929
        %v935 = vunpack.c.l.bf16 %v932
        %v936 = vmul.f32 %v934, %v635
        %v937 = vmul.f32 %v935, %v636
        %v938 = vpack.c.bf16 %v937, %v936
        %v940 = vunpack.c.l.b16 %v924
        %v941 = vunpack.c.h.b16 %v924
        %v942 = vpack.c.b16 %v940, %v940
        %v943 = vpack.c.b16 %v941, %v941
        %v944 = vrot.slane %v909, 6
        %v945 = vrot.slane %v907, 6
        %v947 = vunpack.c.l.b16 %v938
        %v948 = vunpack.c.h.b16 %v938
        %v949 = vpack.c.b16 %v947, %v947
        %v950 = vpack.c.b16 %v948, %v948
        %v953 = vsel %vm563, %v942, %v944
        %v956 = vsel %vm563, %v943, %v945
        %v958 = vsel %vm459, %v953, %v949
        %v960 = vsel %vm459, %v956, %v950
        %v961 = vld [vmem:[%s8] sm:$0x3]
        %962 = vrot.lane.b32.xlu0 %v901, 1
        %v963 = vpop.permute.xlu0 %962
        %964 = vrot.lane.b32.xlu0 %v902, 1
        %v965 = vpop.permute.xlu0 %964
        %v966 = vsel %vm587, %v963, %v965
        %v969 = vsel %vm590, 0, %v963
        %v971 = vunpack.c.l.bf16 %v969
        %v972 = vunpack.c.l.bf16 %v966
        %v973 = vmul.f32 %v971, %v609
        %v974 = vmul.f32 %v972, %v610
        %v975 = vpack.c.bf16 %v974, %v973
        %976 = vrot.lane.b32.xlu0 %v901, 127
        %v977 = vpop.permute.xlu0 %976
        %978 = vrot.lane.b32.xlu0 %v902, 127
        %v979 = vpop.permute.xlu0 %978
        %v980 = vsel %vm618, %v977, %v979
        %v983 = vsel %vm621, %v979, 0
        %v985 = vunpack.c.l.bf16 %v980
        %v986 = vunpack.c.l.bf16 %v983
        %v987 = vmul.f32 %v985, %v635
        %v988 = vmul.f32 %v986, %v636
        %v989 = vpack.c.bf16 %v988, %v987
        %v991 = vunpack.c.l.b16 %v975
        %v992 = vunpack.c.h.b16 %v975
        %v993 = vpack.c.b16 %v991, %v991
        %v994 = vpack.c.b16 %v992, %v992
        %v995 = vrot.slane %v901, 6
        %v996 = vrot.slane %v902, 6
        %v998 = vunpack.c.l.b16 %v989
        %v999 = vunpack.c.h.b16 %v989
        %v1000 = vpack.c.b16 %v998, %v998
        %v1001 = vpack.c.b16 %v999, %v999
        %v1004 = vsel %vm563, %v993, %v995
        %v1007 = vsel %vm563, %v994, %v996
        %v1009 = vsel %vm459, %v1004, %v1000
        %v1011 = vsel %vm459, %v1007, %v1001
        %s1012 = scalar_lea.vmem %s8, 2
        %v1013 = vld [vmem:[%s1012] sm:$0x3]
        %vm1014 = vcmask 97280
        %v1016 = vsel %vm1014, %v1013, 0
        %vm1018 = vcmask 1045504
        %v1019 = vsel %vm1018, %v1009, 0
        %v1021 = vsel %vm1018, %v1011, 0
        %1023 = vmatpush.bf16.msra.mxu0 0
        %1024 = vmatpush.bf16.msra.mxu0 0
        %1025 = vmatpush.bf16.msra.mxu0 0
        %1026 = vmatpush.bf16.msra.mxu0 0
        %1027 = vmatpush.bf16.msra.mxu0 0
        %1028 = vmatpush.bf16.msra.mxu0 0
        %1029 = vmatpush.bf16.msra.mxu0 0
        %1030 = vmatpush.bf16.msra.mxu0 %v1019
        %1031 = vmatmul.bf16.gmra.mxu0 %v1016
        %v1032 = vpop.f32.mrf.mxu0
        %v1033 = vadd.f32 0.0, %v1032
        %v1034 = vpop.f32.mrf.mxu0
        %1035 = vdwg.mxu0
        %1036 = vmatpush.bf16.msra.mxu0 0
        %1037 = vmatpush.bf16.msra.mxu0 0
        %1038 = vmatpush.bf16.msra.mxu0 0
        %1039 = vmatpush.bf16.msra.mxu0 0
        %1040 = vmatpush.bf16.msra.mxu0 0
        %1041 = vmatpush.bf16.msra.mxu0 0
        %1042 = vmatpush.bf16.msra.mxu0 0
        %1043 = vmatpush.bf16.msra.mxu0 %v1021
        %1044 = vmatmul.bf16.gmra.mxu0 %v1016
        %v1045 = vpop.f32.mrf.mxu0
        %v1046 = vadd.f32 0.0, %v1045
        %v1047 = vpop.f32.mrf.mxu0
        %1048 = vdwg.mxu0
        %v1050 = vsel %vm1014, %v961, 0
        %v1052 = vsel %vm1018, %v958, 0
        %v1054 = vsel %vm1018, %v960, 0
        %1056 = vmatpush.bf16.msra.mxu0 0
        %1057 = vmatpush.bf16.msra.mxu0 0
        %1058 = vmatpush.bf16.msra.mxu0 0
        %1059 = vmatpush.bf16.msra.mxu0 0
        %1060 = vmatpush.bf16.msra.mxu0 0
        %1061 = vmatpush.bf16.msra.mxu0 0
        %1062 = vmatpush.bf16.msra.mxu0 0
        %1063 = vmatpush.bf16.msra.mxu0 %v1052
        %1064 = vmatmul.bf16.gmra.mxu0 %v1050
        %v1065 = vpop.f32.mrf.mxu0
        %v1066 = vadd.f32 %v1033, %v1065
        %v1067 = vpop.f32.mrf.mxu0
        %1068 = vdwg.mxu0
        %1069 = vmatpush.bf16.msra.mxu0 0
        %1070 = vmatpush.bf16.msra.mxu0 0
        %1071 = vmatpush.bf16.msra.mxu0 0
        %1072 = vmatpush.bf16.msra.mxu0 0
        %1073 = vmatpush.bf16.msra.mxu0 0
        %1074 = vmatpush.bf16.msra.mxu0 0
        %1075 = vmatpush.bf16.msra.mxu0 0
        %1076 = vmatpush.bf16.msra.mxu0 %v1054
        %1077 = vmatmul.bf16.gmra.mxu0 %v1050
        %v1078 = vpop.f32.mrf.mxu0
        %v1079 = vadd.f32 %v1046, %v1078
        %v1080 = vpop.f32.mrf.mxu0
        %1081 = vdwg.mxu0
        %1082 = vrot.lane.b32.xlu0 %v901, 112
        %v1083 = vpop.permute.xlu0 %1082
        %1084 = vrot.lane.b32.xlu0 %v902, 112
        %v1085 = vpop.permute.xlu0 %1084
        %v1086 = vsel %vm786, %v1083, %v1085
        %v1088 = vsel %vm788, %v1085, 0
        %1090 = vrot.lane.b32.xlu0 %v1086, 1
        %v1091 = vpop.permute.xlu0 %1090
        %1092 = vrot.lane.b32.xlu0 %v1088, 1
        %v1093 = vpop.permute.xlu0 %1092
        %v1094 = vsel %vm587, %v1091, %v1093
        %v1097 = vsel %vm590, 0, %v1091
        %v1099 = vunpack.c.l.bf16 %v1097
        %v1100 = vunpack.c.l.bf16 %v1094
        %v1101 = vmul.f32 %v1099, %v609
        %v1102 = vmul.f32 %v1100, %v610
        %v1103 = vpack.c.bf16 %v1102, %v1101
        %1104 = vrot.lane.b32.xlu0 %v1086, 127
        %v1105 = vpop.permute.xlu0 %1104
        %1106 = vrot.lane.b32.xlu0 %v1088, 127
        %v1107 = vpop.permute.xlu0 %1106
        %v1108 = vsel %vm618, %v1105, %v1107
        %v1111 = vsel %vm621, %v1107, 0
        %v1113 = vunpack.c.l.bf16 %v1108
        %v1114 = vunpack.c.l.bf16 %v1111
        %v1115 = vmul.f32 %v1113, %v635
        %v1116 = vmul.f32 %v1114, %v636
        %v1117 = vpack.c.bf16 %v1116, %v1115
        %v1119 = vunpack.c.l.b16 %v1103
        %v1120 = vunpack.c.h.b16 %v1103
        %v1121 = vpack.c.b16 %v1119, %v1119
        %v1122 = vpack.c.b16 %v1120, %v1120
        %v1123 = vrot.slane %v1086, 6
        %v1124 = vrot.slane %v1088, 6
        %v1126 = vunpack.c.l.b16 %v1117
        %v1127 = vunpack.c.h.b16 %v1117
        %v1128 = vpack.c.b16 %v1126, %v1126
        %v1129 = vpack.c.b16 %v1127, %v1127
        %v1132 = vsel %vm563, %v1121, %v1123
        %v1135 = vsel %vm563, %v1122, %v1124
        %v1137 = vsel %vm459, %v1132, %v1128
        %v1139 = vsel %vm459, %v1135, %v1129
        %s1140 = scalar_lea.vmem %s8, 4
        %v1141 = vld [vmem:[%s1140] sm:$0x3]
        %v1143 = vsel %vm1014, %v1141, 0
        %v1145 = vsel %vm1018, %v1137, 0
        %v1147 = vsel %vm1018, %v1139, 0
        %1149 = vmatpush.bf16.msra.mxu0 0
        %1150 = vmatpush.bf16.msra.mxu0 0
        %1151 = vmatpush.bf16.msra.mxu0 0
        %1152 = vmatpush.bf16.msra.mxu0 0
        %1153 = vmatpush.bf16.msra.mxu0 0
        %1154 = vmatpush.bf16.msra.mxu0 0
        %1155 = vmatpush.bf16.msra.mxu0 0
        %1156 = vmatpush.bf16.msra.mxu0 %v1145
        %1157 = vmatmul.bf16.gmra.mxu0 %v1143
        %v1158 = vpop.f32.mrf.mxu0
        %v1159 = vadd.f32 0.0, %v1158
        %v1160 = vpop.f32.mrf.mxu0
        %1161 = vdwg.mxu0
        %1162 = vmatpush.bf16.msra.mxu0 0
        %1163 = vmatpush.bf16.msra.mxu0 0
        %1164 = vmatpush.bf16.msra.mxu0 0
        %1165 = vmatpush.bf16.msra.mxu0 0
        %1166 = vmatpush.bf16.msra.mxu0 0
        %1167 = vmatpush.bf16.msra.mxu0 0
        %1168 = vmatpush.bf16.msra.mxu0 0
        %1169 = vmatpush.bf16.msra.mxu0 %v1147
        %1170 = vmatmul.bf16.gmra.mxu0 %v1143
        %v1171 = vpop.f32.mrf.mxu0
        %v1172 = vadd.f32 0.0, %v1171
        %v1173 = vpop.f32.mrf.mxu0
        %1174 = vdwg.mxu0
        %v1175 = vadd.f32 %v1066, %v1159
        %v1176 = vadd.f32 %v1079, %v1172
        %v1177 = vld [vmem:[%s9] sm:$0xf]
        %1179 = vset.pattern.permute.xlu0 0
        %1180 = vperm.xlu0 %1179, %v1177
        %v1181 = vpop.permute.xlu0 %1180
        %v1183 = vmul.f32 %v1175, %v1181
        %v1184 = vmul.f32 %v1176, %v1181
        %v1185 = vld [vmem:[%s10] sm:$0xf]
        %1187 = vset.pattern.permute.xlu0 0
        %1188 = vperm.xlu0 %1187, %v1185
        %v1189 = vpop.permute.xlu0 %1188
        %v1191 = vadd.f32 %v1183, %v1189
        %v1192 = vadd.f32 %v1184, %v1189
        %v1193 = vmax.f32 %v1191, 0.0
        %v1194 = vmax.f32 %v1192, 0.0
        %v1195 = vpack.c.bf16 %v1194, %v1193
        %v1197 = vrot.slane %v1195, 2
        %v1200 = vsel %vm563, %v1195, %v1197
        %1202 = vst [vmem:[%s434] sm:$0xf] %v1200
        %s1203 = sand.u32 %s278, 1
        %s1204 = scalar_lea.sflag [#allocation4], %s1203
        %s1205 = sand.u32 %s278, 1
        %s1206 = smul.addr %s1205, 4
        %s1207 = scalar_lea.vmem [#allocation7], %s1206
        // Predicated region
        $region73: #{tpu_custom_call.1} parent=63 // pred_check
          %p1208 = pneg %p288
        $region74: #{tpu_custom_call.1} parent=63 // pred_check_branch
          %1210 = sbr.rel (%p1208) target = $region76
        $region75: #{tpu_custom_call.1} parent=63 // pred_region
          %1212 = vsyncadd %s1204, 0
          %s1213 = smul.addr %s29, 2
          %s1214 = smul.addr %s1213, 2
          %s1215 = scalar_lea.hbm %s11, %s1214
          %s1217 = sshll.u32 %s1207, 4
          %s1218 = int_to_ptr.vmem [resolvable:$true] %s1217
          %s1219 = sshll.u32 %s1215, 4
          %s1220 = int_to_ptr.hbm [resolvable:$true] %s1219
          %1222 = dma.vmem_to_hbm [thread:$0]  %s1218, 64, %s1220, %s1204
        $region76: #{tpu_custom_call.1} parent=63 // pred_fallthru
          _
      $region64: #{tpu_custom_call.1} parent=5 // pred_fallthru
        _
      %p1223 = scmp.le.s32.totalorder 2, %s24
      // Predicated region
      $region77: #{tpu_custom_call.1} parent=5 // pred_check
        %p1224 = pneg %p1223
      $region78: #{tpu_custom_call.1} parent=5 // pred_check_branch
        %1226 = sbr.rel (%p1224) target = $region80
      $region79: #{tpu_custom_call.1} parent=5 // pred_region
        %s1227 = ssub.s32 %s24, 2
        // Predicated region
        $region81: #{tpu_custom_call.1} parent=79 // pred_check
          %p1228 = pneg %p294
        $region82: #{tpu_custom_call.1} parent=79 // pred_check_branch
          %1230 = sbr.rel (%p1228) target = $region84
        $region83: #{tpu_custom_call.1} parent=79 // pred_region
          %s1231 = sand.u32 %s279, 1
          %s1232 = scalar_lea.sflag [#allocation4], %s1231
          %s1233 = sand.u32 %s279, 1
          %s1234 = smul.addr %s1233, 4
          %s1235 = scalar_lea.vmem [#allocation7], %s1234
          %1237 = dma.done %s1232, 64
        $region84: #{tpu_custom_call.1} parent=79 // pred_fallthru
          _
      $region80: #{tpu_custom_call.1} parent=5 // pred_fallthru
        _
    $region6: #{tpu_custom_call.1} parent=1 // loop_footer
      %s28 = sadd.s32 1, %s24
    $region7: #{tpu_custom_call.1} parent=1 // loop_footer_branch
      %23 = sbr.rel target = $region3
    $region8: #{tpu_custom_call.1} parent=1 // loop_exit
      _
    %1238 = vsyncpa [#allocation3], 1
    %s1239 = scalar_lea.sflag [#allocation3], 1
    %1240 = vsyncpa %s1239, 1
    %1241 = vsyncpa [#allocation6], 1
    %1242 = vsyncpa [#allocation4], 1
    %s1243 = scalar_lea.sflag [#allocation4], 1
    %1244 = vsyncpa %s1243, 1

</llo_original>
